<compile_context>
chip_gen: v5e
topology: v5e:2x2
jax: 0.10.0
libtpu: 0.0.40
codegen_flags: <defaults>
</compile_context>

<pallas_src>
import functools

import jax
import jax.numpy as jnp
from jax.experimental import pallas as pl
from jax.experimental.pallas import tpu as pltpu


# ----------------------------- Pallas kernel ------------------------------ #
def downstream_kernel(x_ref, we_ref, w1_ref, b1_ref, w2_ref, b2_ref, out_ref):
    """Fused  logits = relu(tanh(x @ We) @ W1 + b1) @ W2 + b2  (f32 accum)."""
    # frozen encoder stand-in: linear + tanh (tanh -> EUP slot, essentially free)
    z = jnp.dot(x_ref[...], we_ref[...],
                preferred_element_type=jnp.float32)                  # (tm, bb_dim) f32
    z = jnp.tanh(z)                                                  # f32 epilogue
    # head layer 1
    h = jnp.dot(z.astype(jnp.bfloat16), w1_ref[...],
                preferred_element_type=jnp.float32)                  # (tm, hidden)
    h = jnp.maximum(h + b1_ref[...], 0.0)                            # f32 bias + ReLU
    # head layer 2 (lane-padded output -> unmasked vst)
    o = jnp.dot(h.astype(jnp.bfloat16), w2_ref[...],
                preferred_element_type=jnp.float32)                  # (tm, n_pad)
    out_ref[...] = (o + b2_ref[...]).astype(out_ref.dtype)


# --------------------------- one-time param prep --------------------------- #
def prepare_params(params, n_classes):
    """Convert parameters to kernel layout ONCE, outside the jitted hot path."""
    hidden = params["w1"].shape[1]
    n_pad = max(128, ((n_classes + 127) // 128) * 128)
    w2p = jnp.zeros((hidden, n_pad), jnp.bfloat16)
    w2p = w2p.at[:, :n_classes].set(params["w2"].astype(jnp.bfloat16))
    b2p = jnp.zeros((1, n_pad), jnp.float32)
    b2p = b2p.at[:, :n_classes].set(params["b2"].astype(jnp.float32))
    return {
        "w_enc": params["w_enc"].astype(jnp.bfloat16),
        "w1":    params["w1"].astype(jnp.bfloat16),
        "b1":    params["b1"].reshape(1, hidden).astype(jnp.float32),
        "w2":    w2p,
        "b2":    b2p,
    }


# --------------------------- tiling heuristics ----------------------------- #
def _max_tile_rows():
    # v5e MXU is 4x128x128: 128-row tiles already saturate it, taller tiles
    # only add VMEM/latency.  v6e/v7x (2x256x256) benefit from 256 rows.
    try:
        kind = jax.devices()[0].device_kind.lower()
        if "v5" in kind or "v4" in kind:
            return 128
    except Exception:
        pass
    return 256


def _choose_tile_m(B, max_tile):
    b8 = ((B + 7) // 8) * 8
    if b8 <= max_tile:
        return b8                       # single tall tile, grid=(1,)
    # Adaptive tile: balance per-step overhead (~64 "equivalent rows" / step)
    # against padded-row MXU/DMA waste.
    best_tm, best_score = None, None
    tm = max_tile
    while tm >= 8:
        b_pad = ((B + tm - 1) // tm) * tm
        score = b_pad + 64 * (b_pad // tm)
        if best_score is None or score < best_score:
            best_tm, best_score = tm, score
        tm //= 2
    return best_tm


# ------------------------------- wrapper ----------------------------------- #
@functools.partial(jax.jit, static_argnames=("n_classes", "max_tile"))
def _downstream_forward_impl(x, prepared, n_classes, max_tile):
    B = x.shape[0]
    # cast fused with the reshape: kernel consumes bf16 x directly
    x_flat = x.reshape(B, -1).astype(jnp.bfloat16)
    in_feat = x_flat.shape[1]
    bb_dim = prepared["w_enc"].shape[1]
    hidden = prepared["w1"].shape[1]
    n_pad = prepared["w2"].shape[1]

    tile_m = _choose_tile_m(B, max_tile)
    b_pad = ((B + tile_m - 1) // tile_m) * tile_m
    if b_pad != B:
        x_flat = jnp.pad(x_flat, ((0, b_pad - B), (0, 0)))

    grid = (b_pad // tile_m,)

    flops = 2 * b_pad * (in_feat * bb_dim + bb_dim * hidden + hidden * n_pad)
    bytes_accessed = (x_flat.size * 2
                      + prepared["w_enc"].size * 2 + prepared["w1"].size * 2
                      + prepared["w2"].size * 2
                      + prepared["b1"].size * 4 + prepared["b2"].size * 4
                      + b_pad * n_pad * 4)

    # VMEM budget computed from actual buffers (weights + x/out double-buffered
    # + f32 intermediates), with 2x headroom, capped well below physical VMEM.
    weight_bytes = 2 * (in_feat * bb_dim + bb_dim * hidden + hidden * n_pad)
    bias_bytes = 4 * (hidden + n_pad)
    io_tile_bytes = tile_m * in_feat * 2 + tile_m * n_pad * 4
    inter_bytes = tile_m * (bb_dim + hidden + n_pad) * 4
    vmem_needed = 2 * (weight_bytes + bias_bytes + io_tile_bytes) + inter_bytes
    vmem_limit = int(min(32 << 20, max(8 << 20, 2 * vmem_needed)))

    out = pl.pallas_call(
        downstream_kernel,
        out_shape=jax.ShapeDtypeStruct((b_pad, n_pad), jnp.float32),
        grid_spec=pltpu.PrefetchScalarGridSpec(
            num_scalar_prefetch=0,
            grid=grid,
            in_specs=[
                pl.BlockSpec((tile_m, in_feat), lambda i: (i, 0)),   # x tiles over batch
                pl.BlockSpec((in_feat, bb_dim), lambda i: (0, 0)),   # weights: fixed block
                pl.BlockSpec((bb_dim, hidden), lambda i: (0, 0)),    #  -> VMEM-resident
                pl.BlockSpec((1, hidden), lambda i: (0, 0)),
                pl.BlockSpec((hidden, n_pad), lambda i: (0, 0)),
                pl.BlockSpec((1, n_pad), lambda i: (0, 0)),
            ],
            out_specs=pl.BlockSpec((tile_m, n_pad), lambda i: (i, 0)),
        ),
        compiler_params=pltpu.CompilerParams(
            dimension_semantics=("parallel",),      # batch axis -> both v7x TCs
            vmem_limit_bytes=vmem_limit,
        ),
        cost_estimate=pl.CostEstimate(
            flops=flops,
            transcendentals=b_pad * bb_dim,         # tanh
            bytes_accessed=bytes_accessed,
        ),
    )(x_flat, prepared["w_enc"], prepared["w1"], prepared["b1"],
      prepared["w2"], prepared["b2"])

    return out[:B, :n_classes]


def downstream_forward(x, prepared, n_classes):
    # TODO(synk): at tiny B the kernel is weight-DMA latency bound; a
    #             cross-pallas_call weight prefetch (P10) would hide that DMA
    #             behind the preceding op but needs the surrounding graph.
    return _downstream_forward_impl(x, prepared, n_classes, _max_tile_rows())


# ------------------- pure-JAX reference (same precision) ------------------- #
def reference_forward(x, params, n_classes):
    B = x.shape[0]
    x_bf = x.reshape(B, -1).astype(jnp.bfloat16)
    we = params["w_enc"].astype(jnp.bfloat16)
    w1 = params["w1"].astype(jnp.bfloat16)
    w2 = params["w2"].astype(jnp.bfloat16)
    z = jnp.tanh(jnp.dot(x_bf, we, preferred_element_type=jnp.float32))
    h = jnp.maximum(jnp.dot(z.astype(jnp.bfloat16), w1,
                            preferred_element_type=jnp.float32)
                    + params["b1"].astype(jnp.float32), 0.0)
    o = (jnp.dot(h.astype(jnp.bfloat16), w2, preferred_element_type=jnp.float32)
         + params["b2"].astype(jnp.float32))
    return o[:, :n_classes]


def reference_forward_f32(x, params, n_classes):
    B = x.shape[0]
    x_flat = x.reshape(B, -1).astype(jnp.float32)
    z = jnp.tanh(x_flat @ params["w_enc"])
    h = jnp.maximum(z @ params["w1"] + params["b1"], 0.0)
    return (h @ params["w2"] + params["b2"])[:, :n_classes]


# --------------------------------- main ------------------------------------ #
if __name__ == "__main__":
    key = jax.random.PRNGKey(0)
    kx, ke, k1, k2, k3, k4 = jax.random.split(key, 6)

    B, C, H, W = 2, 4, 16, 16          # small NCHW input
    in_feat = C * H * W                # 1024
    bb_dim = 256                       # encoder.out_dim (64 * 2 * 2 feature map)
    hidden = 1024
    n_classes = 6

    x = jax.random.normal(kx, (B, C, H, W), dtype=jnp.float32)

    params = {
        "w_enc": jax.random.normal(ke, (in_feat, bb_dim), dtype=jnp.float32) * 0.02,
        "w1":    jax.random.normal(k1, (bb_dim, hidden), dtype=jnp.float32) * 0.02,
        "b1":    jax.random.normal(k2, (hidden,), dtype=jnp.float32) * 0.01,
        "w2":    jax.random.normal(k3, (hidden, n_classes), dtype=jnp.float32) * 0.02,
        "b2":    jax.random.normal(k4, (n_classes,), dtype=jnp.float32) * 0.01,
    }

    # one-time weight preparation (hoisted out of the per-call forward path)
    prepared = jax.block_until_ready(prepare_params(params, n_classes))

    logits = jax.block_until_ready(downstream_forward(x, prepared, n_classes))

    ref_bf16 = reference_forward(x, params, n_classes)          # same precision path
    ref_f32 = reference_forward_f32(x, params, n_classes)       # full-precision sanity

    assert logits.shape == (B, n_classes)
    assert jnp.allclose(logits, ref_bf16, atol=2e-3, rtol=2e-3)
    assert jnp.allclose(logits, ref_f32, atol=5e-2, rtol=5e-2)
    print("KERNEL_OK")
</pallas_src>

<mosaic_0001>
module attributes {stable_mosaic.version = 11 : i64} {
  func.func @downstream_kernel(%arg0: i32, %arg1: memref<8x1024xbf16, #tpu.memory_space<vmem>>, %arg2: memref<1024x256xbf16, #tpu.memory_space<vmem>>, %arg3: memref<256x1024xbf16, #tpu.memory_space<vmem>>, %arg4: memref<1x1024xf32, #tpu.memory_space<vmem>>, %arg5: memref<1024x128xbf16, #tpu.memory_space<vmem>>, %arg6: memref<1x128xf32, #tpu.memory_space<vmem>>, %arg7: memref<8x128xf32, #tpu.memory_space<vmem>>) attributes {dimension_semantics = [#tpu.dimension_semantics<parallel>], iteration_bounds = array<i64: 1>, scalar_prefetch = 0 : i64, scratch_operands = 0 : i64, tpu.core_type = #tpu.core_type<tc>, window_params = [{transform_indices = @transform_0, window_bounds = array<i64: 8, 1024>}, {pipeline_mode = #tpu.pipeline_mode<synchronous>, transform_indices = @transform_1, window_bounds = array<i64: 1024, 256>}, {pipeline_mode = #tpu.pipeline_mode<synchronous>, transform_indices = @transform_2, window_bounds = array<i64: 256, 1024>}, {pipeline_mode = #tpu.pipeline_mode<synchronous>, transform_indices = @transform_3, window_bounds = array<i64: 1, 1024>}, {pipeline_mode = #tpu.pipeline_mode<synchronous>, transform_indices = @transform_4, window_bounds = array<i64: 1024, 128>}, {pipeline_mode = #tpu.pipeline_mode<synchronous>, transform_indices = @transform_5, window_bounds = array<i64: 1, 128>}, {transform_indices = @transform_6, window_bounds = array<i64: 8, 128>}]} {
    %c0 = arith.constant 0 : index
    %c0_0 = arith.constant 0 : index
    %0 = vector.load %arg1[%c0, %c0_0] : memref<8x1024xbf16, #tpu.memory_space<vmem>>, vector<8x1024xbf16>
    %c0_1 = arith.constant 0 : index
    %c0_2 = arith.constant 0 : index
    %1 = vector.load %arg2[%c0_1, %c0_2] : memref<1024x256xbf16, #tpu.memory_space<vmem>>, vector<1024x256xbf16>
    %cst = arith.constant dense<0.000000e+00> : vector<8x256xf32>
    %2 = tpu.matmul %0, %1, %cst {dimension_numbers = #tpu.dot_dimension_numbers<[1], [0], [0], [1], [0, 0, 1, 1], [], []>} : vector<8x1024xbf16>, vector<1024x256xbf16>, vector<8x256xf32> -> vector<8x256xf32>
    %3 = math.tanh %2 : vector<8x256xf32>
    %4 = arith.truncf %3 : vector<8x256xf32> to vector<8x256xbf16>
    %c0_3 = arith.constant 0 : index
    %c0_4 = arith.constant 0 : index
    %5 = vector.load %arg3[%c0_3, %c0_4] : memref<256x1024xbf16, #tpu.memory_space<vmem>>, vector<256x1024xbf16>
    %cst_5 = arith.constant dense<0.000000e+00> : vector<8x1024xf32>
    %6 = tpu.matmul %4, %5, %cst_5 {dimension_numbers = #tpu.dot_dimension_numbers<[1], [0], [0], [1], [0, 0, 1, 1], [], []>} : vector<8x256xbf16>, vector<256x1024xbf16>, vector<8x1024xf32> -> vector<8x1024xf32>
    %c0_6 = arith.constant 0 : index
    %c0_7 = arith.constant 0 : index
    %7 = vector.load %arg4[%c0_6, %c0_7] : memref<1x1024xf32, #tpu.memory_space<vmem>>, vector<1x1024xf32>
    %8 = vector.broadcast %7 : vector<1x1024xf32> to vector<8x1024xf32>
    %9 = arith.addf %6, %8 : vector<8x1024xf32>
    %cst_8 = arith.constant 0.000000e+00 : f32
    %10 = vector.broadcast %cst_8 : f32 to vector<8x1024xf32>
    %11 = arith.maximumf %9, %10 : vector<8x1024xf32>
    %12 = arith.truncf %11 : vector<8x1024xf32> to vector<8x1024xbf16>
    %c0_9 = arith.constant 0 : index
    %c0_10 = arith.constant 0 : index
    %13 = vector.load %arg5[%c0_9, %c0_10] : memref<1024x128xbf16, #tpu.memory_space<vmem>>, vector<1024x128xbf16>
    %cst_11 = arith.constant dense<0.000000e+00> : vector<8x128xf32>
    %14 = tpu.matmul %12, %13, %cst_11 {dimension_numbers = #tpu.dot_dimension_numbers<[1], [0], [0], [1], [0, 0, 1, 1], [], []>} : vector<8x1024xbf16>, vector<1024x128xbf16>, vector<8x128xf32> -> vector<8x128xf32>
    %c0_12 = arith.constant 0 : index
    %c0_13 = arith.constant 0 : index
    %15 = vector.load %arg6[%c0_12, %c0_13] : memref<1x128xf32, #tpu.memory_space<vmem>>, vector<1x128xf32>
    %16 = vector.broadcast %15 : vector<1x128xf32> to vector<8x128xf32>
    %17 = arith.addf %14, %16 : vector<8x128xf32>
    %c0_14 = arith.constant 0 : index
    %c0_15 = arith.constant 0 : index
    %18 = vector.load %arg7[%c0_14, %c0_15] : memref<8x128xf32, #tpu.memory_space<vmem>>, vector<8x128xf32>
    tpu.vector_store %arg7[%c0_14, %c0_15], %17 {strides = array<i32>} : memref<8x128xf32, #tpu.memory_space<vmem>>, vector<8x128xf32>,
    return
  }
  func.func @transform_0(%arg0: i32) -> (i32, i32) {
    %c0_i32 = arith.constant 0 : i32
    %c0_i32_0 = arith.constant 0 : i32
    return %arg0, %c0_i32 : i32, i32
  }
  func.func @transform_1(%arg0: i32) -> (i32, i32) {
    %c0_i32 = arith.constant 0 : i32
    %c0_i32_0 = arith.constant 0 : i32
    %c0_i32_1 = arith.constant 0 : i32
    return %c0_i32, %c0_i32_0 : i32, i32
  }
  func.func @transform_2(%arg0: i32) -> (i32, i32) {
    %c0_i32 = arith.constant 0 : i32
    %c0_i32_0 = arith.constant 0 : i32
    %c0_i32_1 = arith.constant 0 : i32
    return %c0_i32, %c0_i32_0 : i32, i32
  }
  func.func @transform_3(%arg0: i32) -> (i32, i32) {
    %c0_i32 = arith.constant 0 : i32
    %c0_i32_0 = arith.constant 0 : i32
    %c0_i32_1 = arith.constant 0 : i32
    return %c0_i32, %c0_i32_0 : i32, i32
  }
  func.func @transform_4(%arg0: i32) -> (i32, i32) {
    %c0_i32 = arith.constant 0 : i32
    %c0_i32_0 = arith.constant 0 : i32
    %c0_i32_1 = arith.constant 0 : i32
    return %c0_i32, %c0_i32_0 : i32, i32
  }
  func.func @transform_5(%arg0: i32) -> (i32, i32) {
    %c0_i32 = arith.constant 0 : i32
    %c0_i32_0 = arith.constant 0 : i32
    %c0_i32_1 = arith.constant 0 : i32
    return %c0_i32, %c0_i32_0 : i32, i32
  }
  func.func @transform_6(%arg0: i32) -> (i32, i32) {
    %c0_i32 = arith.constant 0 : i32
    %c0_i32_0 = arith.constant 0 : i32
    return %arg0, %c0_i32 : i32, i32
  }
}

</mosaic_0001>

<llo_original>
// kernel: _downstream_forward_impl.1
$region0: #{_downstream_forward_impl.1}
  #allocation0 [shape = 'u32[]', space=smem, size = 0x4, offset = 0x4, fixed_abs, tag = 'smem constant byte address 0x4 - core index']
  #allocation1 [shape = 'u32[72,128]{1,0:T(1,128)}', space=vmem, size = 0x9000, scoped, tag = 'internal scratch']
  %s0 = inlined_call_operand.vmem [shape: bf16[8,1024], index: 0, kind: input, shape index: {}]
  %s1 = inlined_call_operand.hbm [shape: bf16[1024,256], index: 1, kind: input, shape index: {}]
  %s2 = inlined_call_operand.hbm [shape: bf16[256,1024], index: 2, kind: input, shape index: {}]
  %s3 = inlined_call_operand.vmem [shape: f32[1,1024], index: 3, kind: input, shape index: {}]
  %s4 = inlined_call_operand.hbm [shape: bf16[1024,128], index: 4, kind: input, shape index: {}]
  %s5 = inlined_call_operand.vmem [shape: f32[1,128], index: 5, kind: input, shape index: {}]
  %s6 = inlined_call_operand.vmem [shape: f32[8,128], index: 6, kind: output, shape index: {}]
  %s7 = sld [smem:[#allocation0]]
  $region46: #{_downstream_forward_impl.1} parent=0
    _
  %s9 = ssub.s32 1, %s7
  %s10 = scalar_select 0, %s9, %s7
  $region1: #{_downstream_forward_impl.1} parent=0
    #allocation2 [shape = 'u8[524288]{0}', space=vmem, size = 0x80000, scoped, tag = 'input window, operand 1, single buffered']
    #allocation3 [shape = 's32[1]{0}', space=sflag, size = 0x4, scoped, tag = 'scoped memory for _downstream_forward_impl.1']
    #allocation4 [shape = 'u8[524288]{0}', space=vmem, size = 0x80000, scoped, tag = 'input window, operand 2, single buffered']
    #allocation5 [shape = 's32[1]{0}', space=sflag, size = 0x4, scoped, tag = 'scoped memory for _downstream_forward_impl.1']
    #allocation6 [shape = 'u8[262144]{0}', space=vmem, size = 0x40000, scoped, tag = 'input window, operand 4, single buffered']
    %11 = vsyncpa [#allocation3], 0
    %12 = vsyncpa [#allocation5], 0
    // Predicated region
    $region2: #{_downstream_forward_impl.1} parent=1 // pred_check
      _
    $region3: #{_downstream_forward_impl.1} parent=1 // pred_check_branch
      %14 = sbr.rel (0) target = $region5
    $region4: #{_downstream_forward_impl.1} parent=1 // pred_region
      _
    $region5: #{_downstream_forward_impl.1} parent=1 // pred_fallthru
      _
    // Predicated region
    $region6: #{_downstream_forward_impl.1} parent=1 // pred_check
      _
    $region7: #{_downstream_forward_impl.1} parent=1 // pred_check_branch
      %16 = sbr.rel (0) target = $region9
    $region8: #{_downstream_forward_impl.1} parent=1 // pred_region
      %18 = vsyncadd [#allocation3], 0
      %s19 = sshll.u32 %s1, 4
      %s20 = int_to_ptr.hbm [resolvable:$true] %s19
      %s21 = sshll.u32 [#allocation2], 4
      %s22 = int_to_ptr.vmem [resolvable:$true] %s21
      %27 = dma.hbm_to_vmem [thread:$0]  %s20, 16384, %s22, [#allocation3], 128, 128, 8
    $region9: #{_downstream_forward_impl.1} parent=1 // pred_fallthru
      _
    // Predicated region
    $region10: #{_downstream_forward_impl.1} parent=1 // pred_check
      _
    $region11: #{_downstream_forward_impl.1} parent=1 // pred_check_branch
      %29 = sbr.rel (0) target = $region13
    $region12: #{_downstream_forward_impl.1} parent=1 // pred_region
      %31 = vsyncadd [#allocation5], 0
      %s32 = sshll.u32 %s2, 4
      %s33 = int_to_ptr.hbm [resolvable:$true] %s32
      %s34 = sshll.u32 [#allocation4], 4
      %s35 = int_to_ptr.vmem [resolvable:$true] %s34
      %40 = dma.hbm_to_vmem [thread:$0]  %s33, 16384, %s35, [#allocation5], 512, 512, 32
    $region13: #{_downstream_forward_impl.1} parent=1 // pred_fallthru
      _
    // Predicated region
    $region14: #{_downstream_forward_impl.1} parent=1 // pred_check
      _
    $region15: #{_downstream_forward_impl.1} parent=1 // pred_check_branch
      %42 = sbr.rel (0) target = $region17
    $region16: #{_downstream_forward_impl.1} parent=1 // pred_region
      _
    $region17: #{_downstream_forward_impl.1} parent=1 // pred_fallthru
      _
    // Predicated region
    $region18: #{_downstream_forward_impl.1} parent=1 // pred_check
      _
    $region19: #{_downstream_forward_impl.1} parent=1 // pred_check_branch
      %44 = sbr.rel (0) target = $region21
    $region20: #{_downstream_forward_impl.1} parent=1 // pred_region
      %46 = vsyncadd [#allocation5], 0
      %s47 = sshll.u32 %s4, 4
      %s48 = int_to_ptr.hbm [resolvable:$true] %s47
      %s49 = sshll.u32 [#allocation6], 4
      %s50 = int_to_ptr.vmem [resolvable:$true] %s49
      %55 = dma.hbm_to_vmem [thread:$0]  %s48, 8192, %s50, [#allocation5], 64, 64, 4
    $region21: #{_downstream_forward_impl.1} parent=1 // pred_fallthru
      _
    // Predicated region
    $region22: #{_downstream_forward_impl.1} parent=1 // pred_check
      _
    $region23: #{_downstream_forward_impl.1} parent=1 // pred_check_branch
      %57 = sbr.rel (0) target = $region25
    $region24: #{_downstream_forward_impl.1} parent=1 // pred_region
      _
    $region25: #{_downstream_forward_impl.1} parent=1 // pred_fallthru
      _
    // Predicated region
    $region26: #{_downstream_forward_impl.1} parent=1 // pred_check
      _
    $region27: #{_downstream_forward_impl.1} parent=1 // pred_check_branch
      %59 = sbr.rel (0) target = $region29
    $region28: #{_downstream_forward_impl.1} parent=1 // pred_region
      %61 = dma.done [#allocation3], 16384
    $region29: #{_downstream_forward_impl.1} parent=1 // pred_fallthru
      _
    // Predicated region
    $region30: #{_downstream_forward_impl.1} parent=1 // pred_check
      _
    $region31: #{_downstream_forward_impl.1} parent=1 // pred_check_branch
      %63 = sbr.rel (0) target = $region33
    $region32: #{_downstream_forward_impl.1} parent=1 // pred_region
      %65 = dma.done [#allocation5], 16384
    $region33: #{_downstream_forward_impl.1} parent=1 // pred_fallthru
      _
    // Predicated region
    $region34: #{_downstream_forward_impl.1} parent=1 // pred_check
      _
    $region35: #{_downstream_forward_impl.1} parent=1 // pred_check_branch
      %67 = sbr.rel (0) target = $region37
    $region36: #{_downstream_forward_impl.1} parent=1 // pred_region
      %69 = dma.done [#allocation5], 8192
    $region37: #{_downstream_forward_impl.1} parent=1 // pred_fallthru
      _
    %v70 = vld [vmem:[%s0] sm:$0xff]
    %v71 = vld [vmem:[%s0 + $0x8] sm:$0xff]
    %v72 = vld [vmem:[%s0 + $0x10] sm:$0xff]
    %v73 = vld [vmem:[%s0 + $0x18] sm:$0xff]
    %v74 = vld [vmem:[#allocation2] sm:$0xff]
    %v75 = vld [vmem:[#allocation2 + $0x8] sm:$0xff]
    %v76 = vld [vmem:[#allocation2 + $0x10] sm:$0xff]
    %v77 = vld [vmem:[#allocation2 + $0x18] sm:$0xff]
    %v78 = vld [vmem:[#allocation2 + $0x20] sm:$0xff]
    %v79 = vld [vmem:[#allocation2 + $0x28] sm:$0xff]
    %v80 = vld [vmem:[#allocation2 + $0x30] sm:$0xff]
    %v81 = vld [vmem:[#allocation2 + $0x38] sm:$0xff]
    %v82 = vld [vmem:[#allocation2 + $0x40] sm:$0xff]
    %v83 = vld [vmem:[#allocation2 + $0x48] sm:$0xff]
    %v84 = vld [vmem:[#allocation2 + $0x50] sm:$0xff]
    %v85 = vld [vmem:[#allocation2 + $0x58] sm:$0xff]
    %v86 = vld [vmem:[#allocation2 + $0x60] sm:$0xff]
    %v87 = vld [vmem:[#allocation2 + $0x68] sm:$0xff]
    %v88 = vld [vmem:[#allocation2 + $0x70] sm:$0xff]
    %v89 = vld [vmem:[#allocation2 + $0x78] sm:$0xff]
    %v90 = vld [vmem:[#allocation2 + $0x80] sm:$0xff]
    %v91 = vld [vmem:[#allocation2 + $0x88] sm:$0xff]
    %v92 = vld [vmem:[#allocation2 + $0x90] sm:$0xff]
    %v93 = vld [vmem:[#allocation2 + $0x98] sm:$0xff]
    %v94 = vld [vmem:[#allocation2 + $0xa0] sm:$0xff]
    %v95 = vld [vmem:[#allocation2 + $0xa8] sm:$0xff]
    %v96 = vld [vmem:[#allocation2 + $0xb0] sm:$0xff]
    %v97 = vld [vmem:[#allocation2 + $0xb8] sm:$0xff]
    %v98 = vld [vmem:[#allocation2 + $0xc0] sm:$0xff]
    %v99 = vld [vmem:[#allocation2 + $0xc8] sm:$0xff]
    %v100 = vld [vmem:[#allocation2 + $0xd0] sm:$0xff]
    %v101 = vld [vmem:[#allocation2 + $0xd8] sm:$0xff]
    %v102 = vld [vmem:[#allocation2 + $0xe0] sm:$0xff]
    %v103 = vld [vmem:[#allocation2 + $0xe8] sm:$0xff]
    %v104 = vld [vmem:[#allocation2 + $0xf0] sm:$0xff]
    %v105 = vld [vmem:[#allocation2 + $0xf8] sm:$0xff]
    %v106 = vld [vmem:[#allocation2 + $0x100] sm:$0xff]
    %v107 = vld [vmem:[#allocation2 + $0x108] sm:$0xff]
    %v108 = vld [vmem:[#allocation2 + $0x110] sm:$0xff]
    %v109 = vld [vmem:[#allocation2 + $0x118] sm:$0xff]
    %v110 = vld [vmem:[#allocation2 + $0x120] sm:$0xff]
    %v111 = vld [vmem:[#allocation2 + $0x128] sm:$0xff]
    %v112 = vld [vmem:[#allocation2 + $0x130] sm:$0xff]
    %v113 = vld [vmem:[#allocation2 + $0x138] sm:$0xff]
    %v114 = vld [vmem:[#allocation2 + $0x140] sm:$0xff]
    %v115 = vld [vmem:[#allocation2 + $0x148] sm:$0xff]
    %v116 = vld [vmem:[#allocation2 + $0x150] sm:$0xff]
    %v117 = vld [vmem:[#allocation2 + $0x158] sm:$0xff]
    %v118 = vld [vmem:[#allocation2 + $0x160] sm:$0xff]
    %v119 = vld [vmem:[#allocation2 + $0x168] sm:$0xff]
    %v120 = vld [vmem:[#allocation2 + $0x170] sm:$0xff]
    %v121 = vld [vmem:[#allocation2 + $0x178] sm:$0xff]
    %v122 = vld [vmem:[#allocation2 + $0x180] sm:$0xff]
    %v123 = vld [vmem:[#allocation2 + $0x188] sm:$0xff]
    %v124 = vld [vmem:[#allocation2 + $0x190] sm:$0xff]
    %v125 = vld [vmem:[#allocation2 + $0x198] sm:$0xff]
    %v126 = vld [vmem:[#allocation2 + $0x1a0] sm:$0xff]
    %v127 = vld [vmem:[#allocation2 + $0x1a8] sm:$0xff]
    %v128 = vld [vmem:[#allocation2 + $0x1b0] sm:$0xff]
    %v129 = vld [vmem:[#allocation2 + $0x1b8] sm:$0xff]
    %v130 = vld [vmem:[#allocation2 + $0x1c0] sm:$0xff]
    %v131 = vld [vmem:[#allocation2 + $0x1c8] sm:$0xff]
    %v132 = vld [vmem:[#allocation2 + $0x1d0] sm:$0xff]
    %v133 = vld [vmem:[#allocation2 + $0x1d8] sm:$0xff]
    %v134 = vld [vmem:[#allocation2 + $0x1e0] sm:$0xff]
    %v135 = vld [vmem:[#allocation2 + $0x1e8] sm:$0xff]
    %v136 = vld [vmem:[#allocation2 + $0x1f0] sm:$0xff]
    %v137 = vld [vmem:[#allocation2 + $0x1f8] sm:$0xff]
    %v138 = vld [vmem:[#allocation2 + $0x200] sm:$0xff]
    %v139 = vld [vmem:[#allocation2 + $0x208] sm:$0xff]
    %v140 = vld [vmem:[#allocation2 + $0x210] sm:$0xff]
    %v141 = vld [vmem:[#allocation2 + $0x218] sm:$0xff]
    %v142 = vld [vmem:[#allocation2 + $0x220] sm:$0xff]
    %v143 = vld [vmem:[#allocation2 + $0x228] sm:$0xff]
    %v144 = vld [vmem:[#allocation2 + $0x230] sm:$0xff]
    %v145 = vld [vmem:[#allocation2 + $0x238] sm:$0xff]
    %v146 = vld [vmem:[#allocation2 + $0x240] sm:$0xff]
    %v147 = vld [vmem:[#allocation2 + $0x248] sm:$0xff]
    %v148 = vld [vmem:[#allocation2 + $0x250] sm:$0xff]
    %v149 = vld [vmem:[#allocation2 + $0x258] sm:$0xff]
    %v150 = vld [vmem:[#allocation2 + $0x260] sm:$0xff]
    %v151 = vld [vmem:[#allocation2 + $0x268] sm:$0xff]
    %v152 = vld [vmem:[#allocation2 + $0x270] sm:$0xff]
    %v153 = vld [vmem:[#allocation2 + $0x278] sm:$0xff]
    %v154 = vld [vmem:[#allocation2 + $0x280] sm:$0xff]
    %v155 = vld [vmem:[#allocation2 + $0x288] sm:$0xff]
    %v156 = vld [vmem:[#allocation2 + $0x290] sm:$0xff]
    %v157 = vld [vmem:[#allocation2 + $0x298] sm:$0xff]
    %v158 = vld [vmem:[#allocation2 + $0x2a0] sm:$0xff]
    %v159 = vld [vmem:[#allocation2 + $0x2a8] sm:$0xff]
    %v160 = vld [vmem:[#allocation2 + $0x2b0] sm:$0xff]
    %v161 = vld [vmem:[#allocation2 + $0x2b8] sm:$0xff]
    %v162 = vld [vmem:[#allocation2 + $0x2c0] sm:$0xff]
    %v163 = vld [vmem:[#allocation2 + $0x2c8] sm:$0xff]
    %v164 = vld [vmem:[#allocation2 + $0x2d0] sm:$0xff]
    %v165 = vld [vmem:[#allocation2 + $0x2d8] sm:$0xff]
    %v166 = vld [vmem:[#allocation2 + $0x2e0] sm:$0xff]
    %v167 = vld [vmem:[#allocation2 + $0x2e8] sm:$0xff]
    %v168 = vld [vmem:[#allocation2 + $0x2f0] sm:$0xff]
    %v169 = vld [vmem:[#allocation2 + $0x2f8] sm:$0xff]
    %v170 = vld [vmem:[#allocation2 + $0x300] sm:$0xff]
    %v171 = vld [vmem:[#allocation2 + $0x308] sm:$0xff]
    %v172 = vld [vmem:[#allocation2 + $0x310] sm:$0xff]
    %v173 = vld [vmem:[#allocation2 + $0x318] sm:$0xff]
    %v174 = vld [vmem:[#allocation2 + $0x320] sm:$0xff]
    %v175 = vld [vmem:[#allocation2 + $0x328] sm:$0xff]
    %v176 = vld [vmem:[#allocation2 + $0x330] sm:$0xff]
    %v177 = vld [vmem:[#allocation2 + $0x338] sm:$0xff]
    %v178 = vld [vmem:[#allocation2 + $0x340] sm:$0xff]
    %v179 = vld [vmem:[#allocation2 + $0x348] sm:$0xff]
    %v180 = vld [vmem:[#allocation2 + $0x350] sm:$0xff]
    %v181 = vld [vmem:[#allocation2 + $0x358] sm:$0xff]
    %v182 = vld [vmem:[#allocation2 + $0x360] sm:$0xff]
    %v183 = vld [vmem:[#allocation2 + $0x368] sm:$0xff]
    %v184 = vld [vmem:[#allocation2 + $0x370] sm:$0xff]
    %v185 = vld [vmem:[#allocation2 + $0x378] sm:$0xff]
    %v186 = vld [vmem:[#allocation2 + $0x380] sm:$0xff]
    %v187 = vld [vmem:[#allocation2 + $0x388] sm:$0xff]
    %v188 = vld [vmem:[#allocation2 + $0x390] sm:$0xff]
    %v189 = vld [vmem:[#allocation2 + $0x398] sm:$0xff]
    %v190 = vld [vmem:[#allocation2 + $0x3a0] sm:$0xff]
    %v191 = vld [vmem:[#allocation2 + $0x3a8] sm:$0xff]
    %v192 = vld [vmem:[#allocation2 + $0x3b0] sm:$0xff]
    %v193 = vld [vmem:[#allocation2 + $0x3b8] sm:$0xff]
    %v194 = vld [vmem:[#allocation2 + $0x3c0] sm:$0xff]
    %v195 = vld [vmem:[#allocation2 + $0x3c8] sm:$0xff]
    %v196 = vld [vmem:[#allocation2 + $0x3d0] sm:$0xff]
    %v197 = vld [vmem:[#allocation2 + $0x3d8] sm:$0xff]
    %v198 = vld [vmem:[#allocation2 + $0x3e0] sm:$0xff]
    %v199 = vld [vmem:[#allocation2 + $0x3e8] sm:$0xff]
    %v200 = vld [vmem:[#allocation2 + $0x3f0] sm:$0xff]
    %v201 = vld [vmem:[#allocation2 + $0x3f8] sm:$0xff]
    %v206 = vunpack.c.l.b16 %v70
    %v207 = vunpack.c.h.b16 %v70
    %v208 = vunpack.c.l.b16 %v71
    %v209 = vunpack.c.h.b16 %v71
    %v210 = vunpack.c.l.b16 %v72
    %v211 = vunpack.c.h.b16 %v72
    %v212 = vunpack.c.l.b16 %v73
    %v213 = vunpack.c.h.b16 %v73
    %v214 = vpack.c.b16 %v206, %v206
    %v215 = vpack.c.b16 %v207, %v207
    %v216 = vpack.c.b16 %v208, %v208
    %v217 = vpack.c.b16 %v209, %v209
    %v218 = vpack.c.b16 %v210, %v210
    %v219 = vpack.c.b16 %v211, %v211
    %v220 = vpack.c.b16 %v212, %v212
    %v221 = vpack.c.b16 %v213, %v213
    %v358 = vunpack.c.l.b16 %v74
    %v359 = vunpack.c.h.b16 %v74
    %v360 = vunpack.c.l.b16 %v75
    %v361 = vunpack.c.h.b16 %v75
    %v362 = vunpack.c.l.b16 %v76
    %v363 = vunpack.c.h.b16 %v76
    %v364 = vunpack.c.l.b16 %v77
    %v365 = vunpack.c.h.b16 %v77
    %v366 = vunpack.c.l.b16 %v78
    %v367 = vunpack.c.h.b16 %v78
    %v368 = vunpack.c.l.b16 %v79
    %v369 = vunpack.c.h.b16 %v79
    %v370 = vunpack.c.l.b16 %v80
    %v371 = vunpack.c.h.b16 %v80
    %v372 = vunpack.c.l.b16 %v81
    %v373 = vunpack.c.h.b16 %v81
    %v374 = vunpack.c.l.b16 %v82
    %v375 = vunpack.c.h.b16 %v82
    %v376 = vunpack.c.l.b16 %v83
    %v377 = vunpack.c.h.b16 %v83
    %v378 = vunpack.c.l.b16 %v84
    %v379 = vunpack.c.h.b16 %v84
    %v380 = vunpack.c.l.b16 %v85
    %v381 = vunpack.c.h.b16 %v85
    %v382 = vunpack.c.l.b16 %v86
    %v383 = vunpack.c.h.b16 %v86
    %v384 = vunpack.c.l.b16 %v87
    %v385 = vunpack.c.h.b16 %v87
    %v386 = vunpack.c.l.b16 %v88
    %v387 = vunpack.c.h.b16 %v88
    %v388 = vunpack.c.l.b16 %v89
    %v389 = vunpack.c.h.b16 %v89
    %v390 = vunpack.c.l.b16 %v90
    %v391 = vunpack.c.h.b16 %v90
    %v392 = vunpack.c.l.b16 %v91
    %v393 = vunpack.c.h.b16 %v91
    %v394 = vunpack.c.l.b16 %v92
    %v395 = vunpack.c.h.b16 %v92
    %v396 = vunpack.c.l.b16 %v93
    %v397 = vunpack.c.h.b16 %v93
    %v398 = vunpack.c.l.b16 %v94
    %v399 = vunpack.c.h.b16 %v94
    %v400 = vunpack.c.l.b16 %v95
    %v401 = vunpack.c.h.b16 %v95
    %v402 = vunpack.c.l.b16 %v96
    %v403 = vunpack.c.h.b16 %v96
    %v404 = vunpack.c.l.b16 %v97
    %v405 = vunpack.c.h.b16 %v97
    %v406 = vunpack.c.l.b16 %v98
    %v407 = vunpack.c.h.b16 %v98
    %v408 = vunpack.c.l.b16 %v99
    %v409 = vunpack.c.h.b16 %v99
    %v410 = vunpack.c.l.b16 %v100
    %v411 = vunpack.c.h.b16 %v100
    %v412 = vunpack.c.l.b16 %v101
    %v413 = vunpack.c.h.b16 %v101
    %v414 = vunpack.c.l.b16 %v102
    %v415 = vunpack.c.h.b16 %v102
    %v416 = vunpack.c.l.b16 %v103
    %v417 = vunpack.c.h.b16 %v103
    %v418 = vunpack.c.l.b16 %v104
    %v419 = vunpack.c.h.b16 %v104
    %v420 = vunpack.c.l.b16 %v105
    %v421 = vunpack.c.h.b16 %v105
    %v422 = vunpack.c.l.b16 %v106
    %v423 = vunpack.c.h.b16 %v106
    %v424 = vunpack.c.l.b16 %v107
    %v425 = vunpack.c.h.b16 %v107
    %v426 = vunpack.c.l.b16 %v108
    %v427 = vunpack.c.h.b16 %v108
    %v428 = vunpack.c.l.b16 %v109
    %v429 = vunpack.c.h.b16 %v109
    %v430 = vunpack.c.l.b16 %v110
    %v431 = vunpack.c.h.b16 %v110
    %v432 = vunpack.c.l.b16 %v111
    %v433 = vunpack.c.h.b16 %v111
    %v434 = vunpack.c.l.b16 %v112
    %v435 = vunpack.c.h.b16 %v112
    %v436 = vunpack.c.l.b16 %v113
    %v437 = vunpack.c.h.b16 %v113
    %v438 = vunpack.c.l.b16 %v114
    %v439 = vunpack.c.h.b16 %v114
    %v440 = vunpack.c.l.b16 %v115
    %v441 = vunpack.c.h.b16 %v115
    %v442 = vunpack.c.l.b16 %v116
    %v443 = vunpack.c.h.b16 %v116
    %v444 = vunpack.c.l.b16 %v117
    %v445 = vunpack.c.h.b16 %v117
    %v446 = vunpack.c.l.b16 %v118
    %v447 = vunpack.c.h.b16 %v118
    %v448 = vunpack.c.l.b16 %v119
    %v449 = vunpack.c.h.b16 %v119
    %v450 = vunpack.c.l.b16 %v120
    %v451 = vunpack.c.h.b16 %v120
    %v452 = vunpack.c.l.b16 %v121
    %v453 = vunpack.c.h.b16 %v121
    %v454 = vunpack.c.l.b16 %v122
    %v455 = vunpack.c.h.b16 %v122
    %v456 = vunpack.c.l.b16 %v123
    %v457 = vunpack.c.h.b16 %v123
    %v458 = vunpack.c.l.b16 %v124
    %v459 = vunpack.c.h.b16 %v124
    %v460 = vunpack.c.l.b16 %v125
    %v461 = vunpack.c.h.b16 %v125
    %v462 = vunpack.c.l.b16 %v126
    %v463 = vunpack.c.h.b16 %v126
    %v464 = vunpack.c.l.b16 %v127
    %v465 = vunpack.c.h.b16 %v127
    %v466 = vunpack.c.l.b16 %v128
    %v467 = vunpack.c.h.b16 %v128
    %v468 = vunpack.c.l.b16 %v129
    %v469 = vunpack.c.h.b16 %v129
    %v470 = vunpack.c.l.b16 %v130
    %v471 = vunpack.c.h.b16 %v130
    %v472 = vunpack.c.l.b16 %v131
    %v473 = vunpack.c.h.b16 %v131
    %v474 = vunpack.c.l.b16 %v132
    %v475 = vunpack.c.h.b16 %v132
    %v476 = vunpack.c.l.b16 %v133
    %v477 = vunpack.c.h.b16 %v133
    %v478 = vunpack.c.l.b16 %v134
    %v479 = vunpack.c.h.b16 %v134
    %v480 = vunpack.c.l.b16 %v135
    %v481 = vunpack.c.h.b16 %v135
    %v482 = vunpack.c.l.b16 %v136
    %v483 = vunpack.c.h.b16 %v136
    %v484 = vunpack.c.l.b16 %v137
    %v485 = vunpack.c.h.b16 %v137
    %v486 = vunpack.c.l.b16 %v138
    %v487 = vunpack.c.h.b16 %v138
    %v488 = vunpack.c.l.b16 %v139
    %v489 = vunpack.c.h.b16 %v139
    %v490 = vunpack.c.l.b16 %v140
    %v491 = vunpack.c.h.b16 %v140
    %v492 = vunpack.c.l.b16 %v141
    %v493 = vunpack.c.h.b16 %v141
    %v494 = vunpack.c.l.b16 %v142
    %v495 = vunpack.c.h.b16 %v142
    %v496 = vunpack.c.l.b16 %v143
    %v497 = vunpack.c.h.b16 %v143
    %v498 = vunpack.c.l.b16 %v144
    %v499 = vunpack.c.h.b16 %v144
    %v500 = vunpack.c.l.b16 %v145
    %v501 = vunpack.c.h.b16 %v145
    %v502 = vunpack.c.l.b16 %v146
    %v503 = vunpack.c.h.b16 %v146
    %v504 = vunpack.c.l.b16 %v147
    %v505 = vunpack.c.h.b16 %v147
    %v506 = vunpack.c.l.b16 %v148
    %v507 = vunpack.c.h.b16 %v148
    %v508 = vunpack.c.l.b16 %v149
    %v509 = vunpack.c.h.b16 %v149
    %v510 = vunpack.c.l.b16 %v150
    %v511 = vunpack.c.h.b16 %v150
    %v512 = vunpack.c.l.b16 %v151
    %v513 = vunpack.c.h.b16 %v151
    %v514 = vunpack.c.l.b16 %v152
    %v515 = vunpack.c.h.b16 %v152
    %v516 = vunpack.c.l.b16 %v153
    %v517 = vunpack.c.h.b16 %v153
    %v518 = vunpack.c.l.b16 %v154
    %v519 = vunpack.c.h.b16 %v154
    %v520 = vunpack.c.l.b16 %v155
    %v521 = vunpack.c.h.b16 %v155
    %v522 = vunpack.c.l.b16 %v156
    %v523 = vunpack.c.h.b16 %v156
    %v524 = vunpack.c.l.b16 %v157
    %v525 = vunpack.c.h.b16 %v157
    %v526 = vunpack.c.l.b16 %v158
    %v527 = vunpack.c.h.b16 %v158
    %v528 = vunpack.c.l.b16 %v159
    %v529 = vunpack.c.h.b16 %v159
    %v530 = vunpack.c.l.b16 %v160
    %v531 = vunpack.c.h.b16 %v160
    %v532 = vunpack.c.l.b16 %v161
    %v533 = vunpack.c.h.b16 %v161
    %v534 = vunpack.c.l.b16 %v162
    %v535 = vunpack.c.h.b16 %v162
    %v536 = vunpack.c.l.b16 %v163
    %v537 = vunpack.c.h.b16 %v163
    %v538 = vunpack.c.l.b16 %v164
    %v539 = vunpack.c.h.b16 %v164
    %v540 = vunpack.c.l.b16 %v165
    %v541 = vunpack.c.h.b16 %v165
    %v542 = vunpack.c.l.b16 %v166
    %v543 = vunpack.c.h.b16 %v166
    %v544 = vunpack.c.l.b16 %v167
    %v545 = vunpack.c.h.b16 %v167
    %v546 = vunpack.c.l.b16 %v168
    %v547 = vunpack.c.h.b16 %v168
    %v548 = vunpack.c.l.b16 %v169
    %v549 = vunpack.c.h.b16 %v169
    %v550 = vunpack.c.l.b16 %v170
    %v551 = vunpack.c.h.b16 %v170
    %v552 = vunpack.c.l.b16 %v171
    %v553 = vunpack.c.h.b16 %v171
    %v554 = vunpack.c.l.b16 %v172
    %v555 = vunpack.c.h.b16 %v172
    %v556 = vunpack.c.l.b16 %v173
    %v557 = vunpack.c.h.b16 %v173
    %v558 = vunpack.c.l.b16 %v174
    %v559 = vunpack.c.h.b16 %v174
    %v560 = vunpack.c.l.b16 %v175
    %v561 = vunpack.c.h.b16 %v175
    %v562 = vunpack.c.l.b16 %v176
    %v563 = vunpack.c.h.b16 %v176
    %v564 = vunpack.c.l.b16 %v177
    %v565 = vunpack.c.h.b16 %v177
    %v566 = vunpack.c.l.b16 %v178
    %v567 = vunpack.c.h.b16 %v178
    %v568 = vunpack.c.l.b16 %v179
    %v569 = vunpack.c.h.b16 %v179
    %v570 = vunpack.c.l.b16 %v180
    %v571 = vunpack.c.h.b16 %v180
    %v572 = vunpack.c.l.b16 %v181
    %v573 = vunpack.c.h.b16 %v181
    %v574 = vunpack.c.l.b16 %v182
    %v575 = vunpack.c.h.b16 %v182
    %v576 = vunpack.c.l.b16 %v183
    %v577 = vunpack.c.h.b16 %v183
    %v578 = vunpack.c.l.b16 %v184
    %v579 = vunpack.c.h.b16 %v184
    %v580 = vunpack.c.l.b16 %v185
    %v581 = vunpack.c.h.b16 %v185
    %v582 = vunpack.c.l.b16 %v186
    %v583 = vunpack.c.h.b16 %v186
    %v584 = vunpack.c.l.b16 %v187
    %v585 = vunpack.c.h.b16 %v187
    %v586 = vunpack.c.l.b16 %v188
    %v587 = vunpack.c.h.b16 %v188
    %v588 = vunpack.c.l.b16 %v189
    %v589 = vunpack.c.h.b16 %v189
    %v590 = vunpack.c.l.b16 %v190
    %v591 = vunpack.c.h.b16 %v190
    %v592 = vunpack.c.l.b16 %v191
    %v593 = vunpack.c.h.b16 %v191
    %v594 = vunpack.c.l.b16 %v192
    %v595 = vunpack.c.h.b16 %v192
    %v596 = vunpack.c.l.b16 %v193
    %v597 = vunpack.c.h.b16 %v193
    %v598 = vunpack.c.l.b16 %v194
    %v599 = vunpack.c.h.b16 %v194
    %v600 = vunpack.c.l.b16 %v195
    %v601 = vunpack.c.h.b16 %v195
    %v602 = vunpack.c.l.b16 %v196
    %v603 = vunpack.c.h.b16 %v196
    %v604 = vunpack.c.l.b16 %v197
    %v605 = vunpack.c.h.b16 %v197
    %v606 = vunpack.c.l.b16 %v198
    %v607 = vunpack.c.h.b16 %v198
    %v608 = vunpack.c.l.b16 %v199
    %v609 = vunpack.c.h.b16 %v199
    %v610 = vunpack.c.l.b16 %v200
    %v611 = vunpack.c.h.b16 %v200
    %v612 = vunpack.c.l.b16 %v201
    %v613 = vunpack.c.h.b16 %v201
    %v614 = vpack.c.b16 %v360, %v358
    %v615 = vpack.c.b16 %v361, %v359
    %v616 = vpack.c.b16 %v364, %v362
    %v617 = vpack.c.b16 %v365, %v363
    %v618 = vpack.c.b16 %v368, %v366
    %v619 = vpack.c.b16 %v369, %v367
    %v620 = vpack.c.b16 %v372, %v370
    %v621 = vpack.c.b16 %v373, %v371
    %v622 = vpack.c.b16 %v376, %v374
    %v623 = vpack.c.b16 %v377, %v375
    %v624 = vpack.c.b16 %v380, %v378
    %v625 = vpack.c.b16 %v381, %v379
    %v626 = vpack.c.b16 %v384, %v382
    %v627 = vpack.c.b16 %v385, %v383
    %v628 = vpack.c.b16 %v388, %v386
    %v629 = vpack.c.b16 %v389, %v387
    %v630 = vpack.c.b16 %v392, %v390
    %v631 = vpack.c.b16 %v393, %v391
    %v632 = vpack.c.b16 %v396, %v394
    %v633 = vpack.c.b16 %v397, %v395
    %v634 = vpack.c.b16 %v400, %v398
    %v635 = vpack.c.b16 %v401, %v399
    %v636 = vpack.c.b16 %v404, %v402
    %v637 = vpack.c.b16 %v405, %v403
    %v638 = vpack.c.b16 %v408, %v406
    %v639 = vpack.c.b16 %v409, %v407
    %v640 = vpack.c.b16 %v412, %v410
    %v641 = vpack.c.b16 %v413, %v411
    %v642 = vpack.c.b16 %v416, %v414
    %v643 = vpack.c.b16 %v417, %v415
    %v644 = vpack.c.b16 %v420, %v418
    %v645 = vpack.c.b16 %v421, %v419
    %v646 = vpack.c.b16 %v424, %v422
    %v647 = vpack.c.b16 %v425, %v423
    %v648 = vpack.c.b16 %v428, %v426
    %v649 = vpack.c.b16 %v429, %v427
    %v650 = vpack.c.b16 %v432, %v430
    %v651 = vpack.c.b16 %v433, %v431
    %v652 = vpack.c.b16 %v436, %v434
    %v653 = vpack.c.b16 %v437, %v435
    %v654 = vpack.c.b16 %v440, %v438
    %v655 = vpack.c.b16 %v441, %v439
    %v656 = vpack.c.b16 %v444, %v442
    %v657 = vpack.c.b16 %v445, %v443
    %v658 = vpack.c.b16 %v448, %v446
    %v659 = vpack.c.b16 %v449, %v447
    %v660 = vpack.c.b16 %v452, %v450
    %v661 = vpack.c.b16 %v453, %v451
    %v662 = vpack.c.b16 %v456, %v454
    %v663 = vpack.c.b16 %v457, %v455
    %v664 = vpack.c.b16 %v460, %v458
    %v665 = vpack.c.b16 %v461, %v459
    %v666 = vpack.c.b16 %v464, %v462
    %v667 = vpack.c.b16 %v465, %v463
    %v668 = vpack.c.b16 %v468, %v466
    %v669 = vpack.c.b16 %v469, %v467
    %v670 = vpack.c.b16 %v472, %v470
    %v671 = vpack.c.b16 %v473, %v471
    %v672 = vpack.c.b16 %v476, %v474
    %v673 = vpack.c.b16 %v477, %v475
    %v674 = vpack.c.b16 %v480, %v478
    %v675 = vpack.c.b16 %v481, %v479
    %v676 = vpack.c.b16 %v484, %v482
    %v677 = vpack.c.b16 %v485, %v483
    %v678 = vpack.c.b16 %v488, %v486
    %v679 = vpack.c.b16 %v489, %v487
    %v680 = vpack.c.b16 %v492, %v490
    %v681 = vpack.c.b16 %v493, %v491
    %v682 = vpack.c.b16 %v496, %v494
    %v683 = vpack.c.b16 %v497, %v495
    %v684 = vpack.c.b16 %v500, %v498
    %v685 = vpack.c.b16 %v501, %v499
    %v686 = vpack.c.b16 %v504, %v502
    %v687 = vpack.c.b16 %v505, %v503
    %v688 = vpack.c.b16 %v508, %v506
    %v689 = vpack.c.b16 %v509, %v507
    %v690 = vpack.c.b16 %v512, %v510
    %v691 = vpack.c.b16 %v513, %v511
    %v692 = vpack.c.b16 %v516, %v514
    %v693 = vpack.c.b16 %v517, %v515
    %v694 = vpack.c.b16 %v520, %v518
    %v695 = vpack.c.b16 %v521, %v519
    %v696 = vpack.c.b16 %v524, %v522
    %v697 = vpack.c.b16 %v525, %v523
    %v698 = vpack.c.b16 %v528, %v526
    %v699 = vpack.c.b16 %v529, %v527
    %v700 = vpack.c.b16 %v532, %v530
    %v701 = vpack.c.b16 %v533, %v531
    %v702 = vpack.c.b16 %v536, %v534
    %v703 = vpack.c.b16 %v537, %v535
    %v704 = vpack.c.b16 %v540, %v538
    %v705 = vpack.c.b16 %v541, %v539
    %v706 = vpack.c.b16 %v544, %v542
    %v707 = vpack.c.b16 %v545, %v543
    %v708 = vpack.c.b16 %v548, %v546
    %v709 = vpack.c.b16 %v549, %v547
    %v710 = vpack.c.b16 %v552, %v550
    %v711 = vpack.c.b16 %v553, %v551
    %v712 = vpack.c.b16 %v556, %v554
    %v713 = vpack.c.b16 %v557, %v555
    %v714 = vpack.c.b16 %v560, %v558
    %v715 = vpack.c.b16 %v561, %v559
    %v716 = vpack.c.b16 %v564, %v562
    %v717 = vpack.c.b16 %v565, %v563
    %v718 = vpack.c.b16 %v568, %v566
    %v719 = vpack.c.b16 %v569, %v567
    %v720 = vpack.c.b16 %v572, %v570
    %v721 = vpack.c.b16 %v573, %v571
    %v722 = vpack.c.b16 %v576, %v574
    %v723 = vpack.c.b16 %v577, %v575
    %v724 = vpack.c.b16 %v580, %v578
    %v725 = vpack.c.b16 %v581, %v579
    %v726 = vpack.c.b16 %v584, %v582
    %v727 = vpack.c.b16 %v585, %v583
    %v728 = vpack.c.b16 %v588, %v586
    %v729 = vpack.c.b16 %v589, %v587
    %v730 = vpack.c.b16 %v592, %v590
    %v731 = vpack.c.b16 %v593, %v591
    %v732 = vpack.c.b16 %v596, %v594
    %v733 = vpack.c.b16 %v597, %v595
    %v734 = vpack.c.b16 %v600, %v598
    %v735 = vpack.c.b16 %v601, %v599
    %v736 = vpack.c.b16 %v604, %v602
    %v737 = vpack.c.b16 %v605, %v603
    %v738 = vpack.c.b16 %v608, %v606
    %v739 = vpack.c.b16 %v609, %v607
    %v740 = vpack.c.b16 %v612, %v610
    %v741 = vpack.c.b16 %v613, %v611
    %870 = vmatpush.bf16.msra.mxu0 %v628
    %871 = vmatpush.bf16.msra.mxu0 %v626
    %872 = vmatpush.bf16.msra.mxu0 %v624
    %873 = vmatpush.bf16.msra.mxu0 %v622
    %874 = vmatpush.bf16.msra.mxu0 %v620
    %875 = vmatpush.bf16.msra.mxu0 %v618
    %876 = vmatpush.bf16.msra.mxu0 %v616
    %877 = vmatpush.bf16.msra.mxu0 %v614
    %878 = vmatmul.bf16.gmra.mxu0 %v214
    %v879 = vpop.f32.mrf.mxu0
    %v880 = vadd.f32 0.0, %v879
    %v881 = vpop.f32.mrf.mxu0
    %882 = vdwg.mxu0
    %883 = vmatpush.bf16.msra.mxu0 %v644
    %884 = vmatpush.bf16.msra.mxu0 %v642
    %885 = vmatpush.bf16.msra.mxu0 %v640
    %886 = vmatpush.bf16.msra.mxu0 %v638
    %887 = vmatpush.bf16.msra.mxu0 %v636
    %888 = vmatpush.bf16.msra.mxu0 %v634
    %889 = vmatpush.bf16.msra.mxu0 %v632
    %890 = vmatpush.bf16.msra.mxu0 %v630
    %891 = vmatmul.bf16.gmra.mxu0 %v215
    %v892 = vpop.f32.mrf.mxu0
    %v893 = vadd.f32 %v880, %v892
    %v894 = vpop.f32.mrf.mxu0
    %895 = vdwg.mxu0
    %896 = vmatpush.bf16.msra.mxu0 %v660
    %897 = vmatpush.bf16.msra.mxu0 %v658
    %898 = vmatpush.bf16.msra.mxu0 %v656
    %899 = vmatpush.bf16.msra.mxu0 %v654
    %900 = vmatpush.bf16.msra.mxu0 %v652
    %901 = vmatpush.bf16.msra.mxu0 %v650
    %902 = vmatpush.bf16.msra.mxu0 %v648
    %903 = vmatpush.bf16.msra.mxu0 %v646
    %904 = vmatmul.bf16.gmra.mxu0 %v216
    %v905 = vpop.f32.mrf.mxu0
    %v906 = vadd.f32 %v893, %v905
    %v907 = vpop.f32.mrf.mxu0
    %908 = vdwg.mxu0
    %909 = vmatpush.bf16.msra.mxu0 %v676
    %910 = vmatpush.bf16.msra.mxu0 %v674
    %911 = vmatpush.bf16.msra.mxu0 %v672
    %912 = vmatpush.bf16.msra.mxu0 %v670
    %913 = vmatpush.bf16.msra.mxu0 %v668
    %914 = vmatpush.bf16.msra.mxu0 %v666
    %915 = vmatpush.bf16.msra.mxu0 %v664
    %916 = vmatpush.bf16.msra.mxu0 %v662
    %917 = vmatmul.bf16.gmra.mxu0 %v217
    %v918 = vpop.f32.mrf.mxu0
    %v919 = vadd.f32 %v906, %v918
    %v920 = vpop.f32.mrf.mxu0
    %921 = vdwg.mxu0
    %922 = vmatpush.bf16.msra.mxu0 %v692
    %923 = vmatpush.bf16.msra.mxu0 %v690
    %924 = vmatpush.bf16.msra.mxu0 %v688
    %925 = vmatpush.bf16.msra.mxu0 %v686
    %926 = vmatpush.bf16.msra.mxu0 %v684
    %927 = vmatpush.bf16.msra.mxu0 %v682
    %928 = vmatpush.bf16.msra.mxu0 %v680
    %929 = vmatpush.bf16.msra.mxu0 %v678
    %930 = vmatmul.bf16.gmra.mxu0 %v218
    %v931 = vpop.f32.mrf.mxu0
    %v932 = vadd.f32 %v919, %v931
    %v933 = vpop.f32.mrf.mxu0
    %934 = vdwg.mxu0
    %935 = vmatpush.bf16.msra.mxu0 %v708
    %936 = vmatpush.bf16.msra.mxu0 %v706
    %937 = vmatpush.bf16.msra.mxu0 %v704
    %938 = vmatpush.bf16.msra.mxu0 %v702
    %939 = vmatpush.bf16.msra.mxu0 %v700
    %940 = vmatpush.bf16.msra.mxu0 %v698
    %941 = vmatpush.bf16.msra.mxu0 %v696
    %942 = vmatpush.bf16.msra.mxu0 %v694
    %943 = vmatmul.bf16.gmra.mxu0 %v219
    %v944 = vpop.f32.mrf.mxu0
    %v945 = vadd.f32 %v932, %v944
    %v946 = vpop.f32.mrf.mxu0
    %947 = vdwg.mxu0
    %948 = vmatpush.bf16.msra.mxu0 %v724
    %949 = vmatpush.bf16.msra.mxu0 %v722
    %950 = vmatpush.bf16.msra.mxu0 %v720
    %951 = vmatpush.bf16.msra.mxu0 %v718
    %952 = vmatpush.bf16.msra.mxu0 %v716
    %953 = vmatpush.bf16.msra.mxu0 %v714
    %954 = vmatpush.bf16.msra.mxu0 %v712
    %955 = vmatpush.bf16.msra.mxu0 %v710
    %956 = vmatmul.bf16.gmra.mxu0 %v220
    %v957 = vpop.f32.mrf.mxu0
    %v958 = vadd.f32 %v945, %v957
    %v959 = vpop.f32.mrf.mxu0
    %960 = vdwg.mxu0
    %961 = vmatpush.bf16.msra.mxu0 %v740
    %962 = vmatpush.bf16.msra.mxu0 %v738
    %963 = vmatpush.bf16.msra.mxu0 %v736
    %964 = vmatpush.bf16.msra.mxu0 %v734
    %965 = vmatpush.bf16.msra.mxu0 %v732
    %966 = vmatpush.bf16.msra.mxu0 %v730
    %967 = vmatpush.bf16.msra.mxu0 %v728
    %968 = vmatpush.bf16.msra.mxu0 %v726
    %969 = vmatmul.bf16.gmra.mxu0 %v221
    %v970 = vpop.f32.mrf.mxu0
    %v971 = vadd.f32 %v958, %v970
    %v972 = vpop.f32.mrf.mxu0
    %973 = vdwg.mxu0
    %974 = vmatpush.bf16.msra.mxu0 %v629
    %975 = vmatpush.bf16.msra.mxu0 %v627
    %976 = vmatpush.bf16.msra.mxu0 %v625
    %977 = vmatpush.bf16.msra.mxu0 %v623
    %978 = vmatpush.bf16.msra.mxu0 %v621
    %979 = vmatpush.bf16.msra.mxu0 %v619
    %980 = vmatpush.bf16.msra.mxu0 %v617
    %981 = vmatpush.bf16.msra.mxu0 %v615
    %982 = vmatmul.bf16.gmra.mxu0 %v214
    %v983 = vpop.f32.mrf.mxu0
    %v984 = vadd.f32 0.0, %v983
    %v985 = vpop.f32.mrf.mxu0
    %986 = vdwg.mxu0
    %987 = vmatpush.bf16.msra.mxu0 %v645
    %988 = vmatpush.bf16.msra.mxu0 %v643
    %989 = vmatpush.bf16.msra.mxu0 %v641
    %990 = vmatpush.bf16.msra.mxu0 %v639
    %991 = vmatpush.bf16.msra.mxu0 %v637
    %992 = vmatpush.bf16.msra.mxu0 %v635
    %993 = vmatpush.bf16.msra.mxu0 %v633
    %994 = vmatpush.bf16.msra.mxu0 %v631
    %995 = vmatmul.bf16.gmra.mxu0 %v215
    %v996 = vpop.f32.mrf.mxu0
    %v997 = vadd.f32 %v984, %v996
    %v998 = vpop.f32.mrf.mxu0
    %999 = vdwg.mxu0
    %1000 = vmatpush.bf16.msra.mxu0 %v661
    %1001 = vmatpush.bf16.msra.mxu0 %v659
    %1002 = vmatpush.bf16.msra.mxu0 %v657
    %1003 = vmatpush.bf16.msra.mxu0 %v655
    %1004 = vmatpush.bf16.msra.mxu0 %v653
    %1005 = vmatpush.bf16.msra.mxu0 %v651
    %1006 = vmatpush.bf16.msra.mxu0 %v649
    %1007 = vmatpush.bf16.msra.mxu0 %v647
    %1008 = vmatmul.bf16.gmra.mxu0 %v216
    %v1009 = vpop.f32.mrf.mxu0
    %v1010 = vadd.f32 %v997, %v1009
    %v1011 = vpop.f32.mrf.mxu0
    %1012 = vdwg.mxu0
    %1013 = vmatpush.bf16.msra.mxu0 %v677
    %1014 = vmatpush.bf16.msra.mxu0 %v675
    %1015 = vmatpush.bf16.msra.mxu0 %v673
    %1016 = vmatpush.bf16.msra.mxu0 %v671
    %1017 = vmatpush.bf16.msra.mxu0 %v669
    %1018 = vmatpush.bf16.msra.mxu0 %v667
    %1019 = vmatpush.bf16.msra.mxu0 %v665
    %1020 = vmatpush.bf16.msra.mxu0 %v663
    %1021 = vmatmul.bf16.gmra.mxu0 %v217
    %v1022 = vpop.f32.mrf.mxu0
    %v1023 = vadd.f32 %v1010, %v1022
    %v1024 = vpop.f32.mrf.mxu0
    %1025 = vdwg.mxu0
    %1026 = vmatpush.bf16.msra.mxu0 %v693
    %1027 = vmatpush.bf16.msra.mxu0 %v691
    %1028 = vmatpush.bf16.msra.mxu0 %v689
    %1029 = vmatpush.bf16.msra.mxu0 %v687
    %1030 = vmatpush.bf16.msra.mxu0 %v685
    %1031 = vmatpush.bf16.msra.mxu0 %v683
    %1032 = vmatpush.bf16.msra.mxu0 %v681
    %1033 = vmatpush.bf16.msra.mxu0 %v679
    %1034 = vmatmul.bf16.gmra.mxu0 %v218
    %v1035 = vpop.f32.mrf.mxu0
    %v1036 = vadd.f32 %v1023, %v1035
    %v1037 = vpop.f32.mrf.mxu0
    %1038 = vdwg.mxu0
    %1039 = vmatpush.bf16.msra.mxu0 %v709
    %1040 = vmatpush.bf16.msra.mxu0 %v707
    %1041 = vmatpush.bf16.msra.mxu0 %v705
    %1042 = vmatpush.bf16.msra.mxu0 %v703
    %1043 = vmatpush.bf16.msra.mxu0 %v701
    %1044 = vmatpush.bf16.msra.mxu0 %v699
    %1045 = vmatpush.bf16.msra.mxu0 %v697
    %1046 = vmatpush.bf16.msra.mxu0 %v695
    %1047 = vmatmul.bf16.gmra.mxu0 %v219
    %v1048 = vpop.f32.mrf.mxu0
    %v1049 = vadd.f32 %v1036, %v1048
    %v1050 = vpop.f32.mrf.mxu0
    %1051 = vdwg.mxu0
    %1052 = vmatpush.bf16.msra.mxu0 %v725
    %1053 = vmatpush.bf16.msra.mxu0 %v723
    %1054 = vmatpush.bf16.msra.mxu0 %v721
    %1055 = vmatpush.bf16.msra.mxu0 %v719
    %1056 = vmatpush.bf16.msra.mxu0 %v717
    %1057 = vmatpush.bf16.msra.mxu0 %v715
    %1058 = vmatpush.bf16.msra.mxu0 %v713
    %1059 = vmatpush.bf16.msra.mxu0 %v711
    %1060 = vmatmul.bf16.gmra.mxu0 %v220
    %v1061 = vpop.f32.mrf.mxu0
    %v1062 = vadd.f32 %v1049, %v1061
    %v1063 = vpop.f32.mrf.mxu0
    %1064 = vdwg.mxu0
    %1065 = vmatpush.bf16.msra.mxu0 %v741
    %1066 = vmatpush.bf16.msra.mxu0 %v739
    %1067 = vmatpush.bf16.msra.mxu0 %v737
    %1068 = vmatpush.bf16.msra.mxu0 %v735
    %1069 = vmatpush.bf16.msra.mxu0 %v733
    %1070 = vmatpush.bf16.msra.mxu0 %v731
    %1071 = vmatpush.bf16.msra.mxu0 %v729
    %1072 = vmatpush.bf16.msra.mxu0 %v727
    %1073 = vmatmul.bf16.gmra.mxu0 %v221
    %v1074 = vpop.f32.mrf.mxu0
    %v1075 = vadd.f32 %v1062, %v1074
    %v1076 = vpop.f32.mrf.mxu0
    %1077 = vdwg.mxu0
    %v1078 = vtanh.pop %v971
    %v1079 = vtanh.pop %v1075
    %v1080 = vpack.c.bf16 %v1078, %v1078
    %v1081 = vpack.c.bf16 %v1079, %v1079
    %v1082 = vld [vmem:[#allocation4] sm:$0xff]
    %v1083 = vld [vmem:[#allocation4 + $0x8] sm:$0xff]
    %v1084 = vld [vmem:[#allocation4 + $0x10] sm:$0xff]
    %v1085 = vld [vmem:[#allocation4 + $0x18] sm:$0xff]
    %v1086 = vld [vmem:[#allocation4 + $0x20] sm:$0xff]
    %v1087 = vld [vmem:[#allocation4 + $0x28] sm:$0xff]
    %v1088 = vld [vmem:[#allocation4 + $0x30] sm:$0xff]
    %v1089 = vld [vmem:[#allocation4 + $0x38] sm:$0xff]
    %v1090 = vld [vmem:[#allocation4 + $0x40] sm:$0xff]
    %v1091 = vld [vmem:[#allocation4 + $0x48] sm:$0xff]
    %v1092 = vld [vmem:[#allocation4 + $0x50] sm:$0xff]
    %v1093 = vld [vmem:[#allocation4 + $0x58] sm:$0xff]
    %v1094 = vld [vmem:[#allocation4 + $0x60] sm:$0xff]
    %v1095 = vld [vmem:[#allocation4 + $0x68] sm:$0xff]
    %v1096 = vld [vmem:[#allocation4 + $0x70] sm:$0xff]
    %v1097 = vld [vmem:[#allocation4 + $0x78] sm:$0xff]
    %v1098 = vld [vmem:[#allocation4 + $0x80] sm:$0xff]
    %v1099 = vld [vmem:[#allocation4 + $0x88] sm:$0xff]
    %v1100 = vld [vmem:[#allocation4 + $0x90] sm:$0xff]
    %v1101 = vld [vmem:[#allocation4 + $0x98] sm:$0xff]
    %v1102 = vld [vmem:[#allocation4 + $0xa0] sm:$0xff]
    %v1103 = vld [vmem:[#allocation4 + $0xa8] sm:$0xff]
    %v1104 = vld [vmem:[#allocation4 + $0xb0] sm:$0xff]
    %v1105 = vld [vmem:[#allocation4 + $0xb8] sm:$0xff]
    %v1106 = vld [vmem:[#allocation4 + $0xc0] sm:$0xff]
    %v1107 = vld [vmem:[#allocation4 + $0xc8] sm:$0xff]
    %v1108 = vld [vmem:[#allocation4 + $0xd0] sm:$0xff]
    %v1109 = vld [vmem:[#allocation4 + $0xd8] sm:$0xff]
    %v1110 = vld [vmem:[#allocation4 + $0xe0] sm:$0xff]
    %v1111 = vld [vmem:[#allocation4 + $0xe8] sm:$0xff]
    %v1112 = vld [vmem:[#allocation4 + $0xf0] sm:$0xff]
    %v1113 = vld [vmem:[#allocation4 + $0xf8] sm:$0xff]
    %v1114 = vld [vmem:[#allocation4 + $0x100] sm:$0xff]
    %v1115 = vld [vmem:[#allocation4 + $0x108] sm:$0xff]
    %v1116 = vld [vmem:[#allocation4 + $0x110] sm:$0xff]
    %v1117 = vld [vmem:[#allocation4 + $0x118] sm:$0xff]
    %v1118 = vld [vmem:[#allocation4 + $0x120] sm:$0xff]
    %v1119 = vld [vmem:[#allocation4 + $0x128] sm:$0xff]
    %v1120 = vld [vmem:[#allocation4 + $0x130] sm:$0xff]
    %v1121 = vld [vmem:[#allocation4 + $0x138] sm:$0xff]
    %v1122 = vld [vmem:[#allocation4 + $0x140] sm:$0xff]
    %v1123 = vld [vmem:[#allocation4 + $0x148] sm:$0xff]
    %v1124 = vld [vmem:[#allocation4 + $0x150] sm:$0xff]
    %v1125 = vld [vmem:[#allocation4 + $0x158] sm:$0xff]
    %v1126 = vld [vmem:[#allocation4 + $0x160] sm:$0xff]
    %v1127 = vld [vmem:[#allocation4 + $0x168] sm:$0xff]
    %v1128 = vld [vmem:[#allocation4 + $0x170] sm:$0xff]
    %v1129 = vld [vmem:[#allocation4 + $0x178] sm:$0xff]
    %v1130 = vld [vmem:[#allocation4 + $0x180] sm:$0xff]
    %v1131 = vld [vmem:[#allocation4 + $0x188] sm:$0xff]
    %v1132 = vld [vmem:[#allocation4 + $0x190] sm:$0xff]
    %v1133 = vld [vmem:[#allocation4 + $0x198] sm:$0xff]
    %v1134 = vld [vmem:[#allocation4 + $0x1a0] sm:$0xff]
    %v1135 = vld [vmem:[#allocation4 + $0x1a8] sm:$0xff]
    %v1136 = vld [vmem:[#allocation4 + $0x1b0] sm:$0xff]
    %v1137 = vld [vmem:[#allocation4 + $0x1b8] sm:$0xff]
    %v1138 = vld [vmem:[#allocation4 + $0x1c0] sm:$0xff]
    %v1139 = vld [vmem:[#allocation4 + $0x1c8] sm:$0xff]
    %v1140 = vld [vmem:[#allocation4 + $0x1d0] sm:$0xff]
    %v1141 = vld [vmem:[#allocation4 + $0x1d8] sm:$0xff]
    %v1142 = vld [vmem:[#allocation4 + $0x1e0] sm:$0xff]
    %v1143 = vld [vmem:[#allocation4 + $0x1e8] sm:$0xff]
    %v1144 = vld [vmem:[#allocation4 + $0x1f0] sm:$0xff]
    %v1145 = vld [vmem:[#allocation4 + $0x1f8] sm:$0xff]
    %v1146 = vld [vmem:[#allocation4 + $0x200] sm:$0xff]
    %v1147 = vld [vmem:[#allocation4 + $0x208] sm:$0xff]
    %v1148 = vld [vmem:[#allocation4 + $0x210] sm:$0xff]
    %v1149 = vld [vmem:[#allocation4 + $0x218] sm:$0xff]
    %v1150 = vld [vmem:[#allocation4 + $0x220] sm:$0xff]
    %v1151 = vld [vmem:[#allocation4 + $0x228] sm:$0xff]
    %v1152 = vld [vmem:[#allocation4 + $0x230] sm:$0xff]
    %v1153 = vld [vmem:[#allocation4 + $0x238] sm:$0xff]
    %v1154 = vld [vmem:[#allocation4 + $0x240] sm:$0xff]
    %v1155 = vld [vmem:[#allocation4 + $0x248] sm:$0xff]
    %v1156 = vld [vmem:[#allocation4 + $0x250] sm:$0xff]
    %v1157 = vld [vmem:[#allocation4 + $0x258] sm:$0xff]
    %v1158 = vld [vmem:[#allocation4 + $0x260] sm:$0xff]
    %v1159 = vld [vmem:[#allocation4 + $0x268] sm:$0xff]
    %v1160 = vld [vmem:[#allocation4 + $0x270] sm:$0xff]
    %v1161 = vld [vmem:[#allocation4 + $0x278] sm:$0xff]
    %v1162 = vld [vmem:[#allocation4 + $0x280] sm:$0xff]
    %v1163 = vld [vmem:[#allocation4 + $0x288] sm:$0xff]
    %v1164 = vld [vmem:[#allocation4 + $0x290] sm:$0xff]
    %v1165 = vld [vmem:[#allocation4 + $0x298] sm:$0xff]
    %v1166 = vld [vmem:[#allocation4 + $0x2a0] sm:$0xff]
    %v1167 = vld [vmem:[#allocation4 + $0x2a8] sm:$0xff]
    %v1168 = vld [vmem:[#allocation4 + $0x2b0] sm:$0xff]
    %v1169 = vld [vmem:[#allocation4 + $0x2b8] sm:$0xff]
    %v1170 = vld [vmem:[#allocation4 + $0x2c0] sm:$0xff]
    %v1171 = vld [vmem:[#allocation4 + $0x2c8] sm:$0xff]
    %v1172 = vld [vmem:[#allocation4 + $0x2d0] sm:$0xff]
    %v1173 = vld [vmem:[#allocation4 + $0x2d8] sm:$0xff]
    %v1174 = vld [vmem:[#allocation4 + $0x2e0] sm:$0xff]
    %v1175 = vld [vmem:[#allocation4 + $0x2e8] sm:$0xff]
    %v1176 = vld [vmem:[#allocation4 + $0x2f0] sm:$0xff]
    %v1177 = vld [vmem:[#allocation4 + $0x2f8] sm:$0xff]
    %v1178 = vld [vmem:[#allocation4 + $0x300] sm:$0xff]
    %v1179 = vld [vmem:[#allocation4 + $0x308] sm:$0xff]
    %v1180 = vld [vmem:[#allocation4 + $0x310] sm:$0xff]
    %v1181 = vld [vmem:[#allocation4 + $0x318] sm:$0xff]
    %v1182 = vld [vmem:[#allocation4 + $0x320] sm:$0xff]
    %v1183 = vld [vmem:[#allocation4 + $0x328] sm:$0xff]
    %v1184 = vld [vmem:[#allocation4 + $0x330] sm:$0xff]
    %v1185 = vld [vmem:[#allocation4 + $0x338] sm:$0xff]
    %v1186 = vld [vmem:[#allocation4 + $0x340] sm:$0xff]
    %v1187 = vld [vmem:[#allocation4 + $0x348] sm:$0xff]
    %v1188 = vld [vmem:[#allocation4 + $0x350] sm:$0xff]
    %v1189 = vld [vmem:[#allocation4 + $0x358] sm:$0xff]
    %v1190 = vld [vmem:[#allocation4 + $0x360] sm:$0xff]
    %v1191 = vld [vmem:[#allocation4 + $0x368] sm:$0xff]
    %v1192 = vld [vmem:[#allocation4 + $0x370] sm:$0xff]
    %v1193 = vld [vmem:[#allocation4 + $0x378] sm:$0xff]
    %v1194 = vld [vmem:[#allocation4 + $0x380] sm:$0xff]
    %v1195 = vld [vmem:[#allocation4 + $0x388] sm:$0xff]
    %v1196 = vld [vmem:[#allocation4 + $0x390] sm:$0xff]
    %v1197 = vld [vmem:[#allocation4 + $0x398] sm:$0xff]
    %v1198 = vld [vmem:[#allocation4 + $0x3a0] sm:$0xff]
    %v1199 = vld [vmem:[#allocation4 + $0x3a8] sm:$0xff]
    %v1200 = vld [vmem:[#allocation4 + $0x3b0] sm:$0xff]
    %v1201 = vld [vmem:[#allocation4 + $0x3b8] sm:$0xff]
    %v1202 = vld [vmem:[#allocation4 + $0x3c0] sm:$0xff]
    %v1203 = vld [vmem:[#allocation4 + $0x3c8] sm:$0xff]
    %v1204 = vld [vmem:[#allocation4 + $0x3d0] sm:$0xff]
    %v1205 = vld [vmem:[#allocation4 + $0x3d8] sm:$0xff]
    %v1206 = vld [vmem:[#allocation4 + $0x3e0] sm:$0xff]
    %v1207 = vld [vmem:[#allocation4 + $0x3e8] sm:$0xff]
    %v1208 = vld [vmem:[#allocation4 + $0x3f0] sm:$0xff]
    %v1209 = vld [vmem:[#allocation4 + $0x3f8] sm:$0xff]
    %v1210 = vld [vmem:[%s3] sm:$0xff]
    %v1212 = vperm.slane %v1210, 0
    %v1213 = vperm.slane %v1210, 1
    %v1214 = vperm.slane %v1210, 2
    %v1215 = vperm.slane %v1210, 3
    %v1216 = vperm.slane %v1210, 4
    %v1217 = vperm.slane %v1210, 5
    %v1218 = vperm.slane %v1210, 6
    %v1219 = vperm.slane %v1210, 7
    %v1356 = vunpack.c.l.b16 %v1082
    %v1357 = vunpack.c.h.b16 %v1082
    %v1358 = vunpack.c.l.b16 %v1083
    %v1359 = vunpack.c.h.b16 %v1083
    %v1360 = vunpack.c.l.b16 %v1084
    %v1361 = vunpack.c.h.b16 %v1084
    %v1362 = vunpack.c.l.b16 %v1085
    %v1363 = vunpack.c.h.b16 %v1085
    %v1364 = vunpack.c.l.b16 %v1086
    %v1365 = vunpack.c.h.b16 %v1086
    %v1366 = vunpack.c.l.b16 %v1087
    %v1367 = vunpack.c.h.b16 %v1087
    %v1368 = vunpack.c.l.b16 %v1088
    %v1369 = vunpack.c.h.b16 %v1088
    %v1370 = vunpack.c.l.b16 %v1089
    %v1371 = vunpack.c.h.b16 %v1089
    %v1372 = vunpack.c.l.b16 %v1090
    %v1373 = vunpack.c.h.b16 %v1090
    %v1374 = vunpack.c.l.b16 %v1091
    %v1375 = vunpack.c.h.b16 %v1091
    %v1376 = vunpack.c.l.b16 %v1092
    %v1377 = vunpack.c.h.b16 %v1092
    %v1378 = vunpack.c.l.b16 %v1093
    %v1379 = vunpack.c.h.b16 %v1093
    %v1380 = vunpack.c.l.b16 %v1094
    %v1381 = vunpack.c.h.b16 %v1094
    %v1382 = vunpack.c.l.b16 %v1095
    %v1383 = vunpack.c.h.b16 %v1095
    %v1384 = vunpack.c.l.b16 %v1096
    %v1385 = vunpack.c.h.b16 %v1096
    %v1386 = vunpack.c.l.b16 %v1097
    %v1387 = vunpack.c.h.b16 %v1097
    %v1388 = vunpack.c.l.b16 %v1098
    %v1389 = vunpack.c.h.b16 %v1098
    %v1390 = vunpack.c.l.b16 %v1099
    %v1391 = vunpack.c.h.b16 %v1099
    %v1392 = vunpack.c.l.b16 %v1100
    %v1393 = vunpack.c.h.b16 %v1100
    %v1394 = vunpack.c.l.b16 %v1101
    %v1395 = vunpack.c.h.b16 %v1101
    %v1396 = vunpack.c.l.b16 %v1102
    %v1397 = vunpack.c.h.b16 %v1102
    %v1398 = vunpack.c.l.b16 %v1103
    %v1399 = vunpack.c.h.b16 %v1103
    %v1400 = vunpack.c.l.b16 %v1104
    %v1401 = vunpack.c.h.b16 %v1104
    %v1402 = vunpack.c.l.b16 %v1105
    %v1403 = vunpack.c.h.b16 %v1105
    %v1404 = vunpack.c.l.b16 %v1106
    %v1405 = vunpack.c.h.b16 %v1106
    %v1406 = vunpack.c.l.b16 %v1107
    %v1407 = vunpack.c.h.b16 %v1107
    %v1408 = vunpack.c.l.b16 %v1108
    %v1409 = vunpack.c.h.b16 %v1108
    %v1410 = vunpack.c.l.b16 %v1109
    %v1411 = vunpack.c.h.b16 %v1109
    %v1412 = vunpack.c.l.b16 %v1110
    %v1413 = vunpack.c.h.b16 %v1110
    %v1414 = vunpack.c.l.b16 %v1111
    %v1415 = vunpack.c.h.b16 %v1111
    %v1416 = vunpack.c.l.b16 %v1112
    %v1417 = vunpack.c.h.b16 %v1112
    %v1418 = vunpack.c.l.b16 %v1113
    %v1419 = vunpack.c.h.b16 %v1113
    %v1420 = vunpack.c.l.b16 %v1114
    %v1421 = vunpack.c.h.b16 %v1114
    %v1422 = vunpack.c.l.b16 %v1115
    %v1423 = vunpack.c.h.b16 %v1115
    %v1424 = vunpack.c.l.b16 %v1116
    %v1425 = vunpack.c.h.b16 %v1116
    %v1426 = vunpack.c.l.b16 %v1117
    %v1427 = vunpack.c.h.b16 %v1117
    %v1428 = vunpack.c.l.b16 %v1118
    %v1429 = vunpack.c.h.b16 %v1118
    %v1430 = vunpack.c.l.b16 %v1119
    %v1431 = vunpack.c.h.b16 %v1119
    %v1432 = vunpack.c.l.b16 %v1120
    %v1433 = vunpack.c.h.b16 %v1120
    %v1434 = vunpack.c.l.b16 %v1121
    %v1435 = vunpack.c.h.b16 %v1121
    %v1436 = vunpack.c.l.b16 %v1122
    %v1437 = vunpack.c.h.b16 %v1122
    %v1438 = vunpack.c.l.b16 %v1123
    %v1439 = vunpack.c.h.b16 %v1123
    %v1440 = vunpack.c.l.b16 %v1124
    %v1441 = vunpack.c.h.b16 %v1124
    %v1442 = vunpack.c.l.b16 %v1125
    %v1443 = vunpack.c.h.b16 %v1125
    %v1444 = vunpack.c.l.b16 %v1126
    %v1445 = vunpack.c.h.b16 %v1126
    %v1446 = vunpack.c.l.b16 %v1127
    %v1447 = vunpack.c.h.b16 %v1127
    %v1448 = vunpack.c.l.b16 %v1128
    %v1449 = vunpack.c.h.b16 %v1128
    %v1450 = vunpack.c.l.b16 %v1129
    %v1451 = vunpack.c.h.b16 %v1129
    %v1452 = vunpack.c.l.b16 %v1130
    %v1453 = vunpack.c.h.b16 %v1130
    %v1454 = vunpack.c.l.b16 %v1131
    %v1455 = vunpack.c.h.b16 %v1131
    %v1456 = vunpack.c.l.b16 %v1132
    %v1457 = vunpack.c.h.b16 %v1132
    %v1458 = vunpack.c.l.b16 %v1133
    %v1459 = vunpack.c.h.b16 %v1133
    %v1460 = vunpack.c.l.b16 %v1134
    %v1461 = vunpack.c.h.b16 %v1134
    %v1462 = vunpack.c.l.b16 %v1135
    %v1463 = vunpack.c.h.b16 %v1135
    %v1464 = vunpack.c.l.b16 %v1136
    %v1465 = vunpack.c.h.b16 %v1136
    %v1466 = vunpack.c.l.b16 %v1137
    %v1467 = vunpack.c.h.b16 %v1137
    %v1468 = vunpack.c.l.b16 %v1138
    %v1469 = vunpack.c.h.b16 %v1138
    %v1470 = vunpack.c.l.b16 %v1139
    %v1471 = vunpack.c.h.b16 %v1139
    %v1472 = vunpack.c.l.b16 %v1140
    %v1473 = vunpack.c.h.b16 %v1140
    %v1474 = vunpack.c.l.b16 %v1141
    %v1475 = vunpack.c.h.b16 %v1141
    %v1476 = vunpack.c.l.b16 %v1142
    %v1477 = vunpack.c.h.b16 %v1142
    %v1478 = vunpack.c.l.b16 %v1143
    %v1479 = vunpack.c.h.b16 %v1143
    %v1480 = vunpack.c.l.b16 %v1144
    %v1481 = vunpack.c.h.b16 %v1144
    %v1482 = vunpack.c.l.b16 %v1145
    %v1483 = vunpack.c.h.b16 %v1145
    %v1484 = vunpack.c.l.b16 %v1146
    %v1485 = vunpack.c.h.b16 %v1146
    %v1486 = vunpack.c.l.b16 %v1147
    %v1487 = vunpack.c.h.b16 %v1147
    %v1488 = vunpack.c.l.b16 %v1148
    %v1489 = vunpack.c.h.b16 %v1148
    %v1490 = vunpack.c.l.b16 %v1149
    %v1491 = vunpack.c.h.b16 %v1149
    %v1492 = vunpack.c.l.b16 %v1150
    %v1493 = vunpack.c.h.b16 %v1150
    %v1494 = vunpack.c.l.b16 %v1151
    %v1495 = vunpack.c.h.b16 %v1151
    %v1496 = vunpack.c.l.b16 %v1152
    %v1497 = vunpack.c.h.b16 %v1152
    %v1498 = vunpack.c.l.b16 %v1153
    %v1499 = vunpack.c.h.b16 %v1153
    %v1500 = vunpack.c.l.b16 %v1154
    %v1501 = vunpack.c.h.b16 %v1154
    %v1502 = vunpack.c.l.b16 %v1155
    %v1503 = vunpack.c.h.b16 %v1155
    %v1504 = vunpack.c.l.b16 %v1156
    %v1505 = vunpack.c.h.b16 %v1156
    %v1506 = vunpack.c.l.b16 %v1157
    %v1507 = vunpack.c.h.b16 %v1157
    %v1508 = vunpack.c.l.b16 %v1158
    %v1509 = vunpack.c.h.b16 %v1158
    %v1510 = vunpack.c.l.b16 %v1159
    %v1511 = vunpack.c.h.b16 %v1159
    %v1512 = vunpack.c.l.b16 %v1160
    %v1513 = vunpack.c.h.b16 %v1160
    %v1514 = vunpack.c.l.b16 %v1161
    %v1515 = vunpack.c.h.b16 %v1161
    %v1516 = vunpack.c.l.b16 %v1162
    %v1517 = vunpack.c.h.b16 %v1162
    %v1518 = vunpack.c.l.b16 %v1163
    %v1519 = vunpack.c.h.b16 %v1163
    %v1520 = vunpack.c.l.b16 %v1164
    %v1521 = vunpack.c.h.b16 %v1164
    %v1522 = vunpack.c.l.b16 %v1165
    %v1523 = vunpack.c.h.b16 %v1165
    %v1524 = vunpack.c.l.b16 %v1166
    %v1525 = vunpack.c.h.b16 %v1166
    %v1526 = vunpack.c.l.b16 %v1167
    %v1527 = vunpack.c.h.b16 %v1167
    %v1528 = vunpack.c.l.b16 %v1168
    %v1529 = vunpack.c.h.b16 %v1168
    %v1530 = vunpack.c.l.b16 %v1169
    %v1531 = vunpack.c.h.b16 %v1169
    %v1532 = vunpack.c.l.b16 %v1170
    %v1533 = vunpack.c.h.b16 %v1170
    %v1534 = vunpack.c.l.b16 %v1171
    %v1535 = vunpack.c.h.b16 %v1171
    %v1536 = vunpack.c.l.b16 %v1172
    %v1537 = vunpack.c.h.b16 %v1172
    %v1538 = vunpack.c.l.b16 %v1173
    %v1539 = vunpack.c.h.b16 %v1173
    %v1540 = vunpack.c.l.b16 %v1174
    %v1541 = vunpack.c.h.b16 %v1174
    %v1542 = vunpack.c.l.b16 %v1175
    %v1543 = vunpack.c.h.b16 %v1175
    %v1544 = vunpack.c.l.b16 %v1176
    %v1545 = vunpack.c.h.b16 %v1176
    %v1546 = vunpack.c.l.b16 %v1177
    %v1547 = vunpack.c.h.b16 %v1177
    %v1548 = vunpack.c.l.b16 %v1178
    %v1549 = vunpack.c.h.b16 %v1178
    %v1550 = vunpack.c.l.b16 %v1179
    %v1551 = vunpack.c.h.b16 %v1179
    %v1552 = vunpack.c.l.b16 %v1180
    %v1553 = vunpack.c.h.b16 %v1180
    %v1554 = vunpack.c.l.b16 %v1181
    %v1555 = vunpack.c.h.b16 %v1181
    %v1556 = vunpack.c.l.b16 %v1182
    %v1557 = vunpack.c.h.b16 %v1182
    %v1558 = vunpack.c.l.b16 %v1183
    %v1559 = vunpack.c.h.b16 %v1183
    %v1560 = vunpack.c.l.b16 %v1184
    %v1561 = vunpack.c.h.b16 %v1184
    %v1562 = vunpack.c.l.b16 %v1185
    %v1563 = vunpack.c.h.b16 %v1185
    %v1564 = vunpack.c.l.b16 %v1186
    %v1565 = vunpack.c.h.b16 %v1186
    %v1566 = vunpack.c.l.b16 %v1187
    %v1567 = vunpack.c.h.b16 %v1187
    %v1568 = vunpack.c.l.b16 %v1188
    %v1569 = vunpack.c.h.b16 %v1188
    %v1570 = vunpack.c.l.b16 %v1189
    %v1571 = vunpack.c.h.b16 %v1189
    %v1572 = vunpack.c.l.b16 %v1190
    %v1573 = vunpack.c.h.b16 %v1190
    %v1574 = vunpack.c.l.b16 %v1191
    %v1575 = vunpack.c.h.b16 %v1191
    %v1576 = vunpack.c.l.b16 %v1192
    %v1577 = vunpack.c.h.b16 %v1192
    %v1578 = vunpack.c.l.b16 %v1193
    %v1579 = vunpack.c.h.b16 %v1193
    %v1580 = vunpack.c.l.b16 %v1194
    %v1581 = vunpack.c.h.b16 %v1194
    %v1582 = vunpack.c.l.b16 %v1195
    %v1583 = vunpack.c.h.b16 %v1195
    %v1584 = vunpack.c.l.b16 %v1196
    %v1585 = vunpack.c.h.b16 %v1196
    %v1586 = vunpack.c.l.b16 %v1197
    %v1587 = vunpack.c.h.b16 %v1197
    %v1588 = vunpack.c.l.b16 %v1198
    %v1589 = vunpack.c.h.b16 %v1198
    %v1590 = vunpack.c.l.b16 %v1199
    %v1591 = vunpack.c.h.b16 %v1199
    %v1592 = vunpack.c.l.b16 %v1200
    %v1593 = vunpack.c.h.b16 %v1200
    %v1594 = vunpack.c.l.b16 %v1201
    %v1595 = vunpack.c.h.b16 %v1201
    %v1596 = vunpack.c.l.b16 %v1202
    %v1597 = vunpack.c.h.b16 %v1202
    %v1598 = vunpack.c.l.b16 %v1203
    %v1599 = vunpack.c.h.b16 %v1203
    %v1600 = vunpack.c.l.b16 %v1204
    %v1601 = vunpack.c.h.b16 %v1204
    %v1602 = vunpack.c.l.b16 %v1205
    %v1603 = vunpack.c.h.b16 %v1205
    %v1604 = vunpack.c.l.b16 %v1206
    %v1605 = vunpack.c.h.b16 %v1206
    %v1606 = vunpack.c.l.b16 %v1207
    %v1607 = vunpack.c.h.b16 %v1207
    %v1608 = vunpack.c.l.b16 %v1208
    %v1609 = vunpack.c.h.b16 %v1208
    %v1610 = vunpack.c.l.b16 %v1209
    %v1611 = vunpack.c.h.b16 %v1209
    %v1612 = vpack.c.b16 %v1364, %v1356
    %v1613 = vpack.c.b16 %v1365, %v1357
    %v1614 = vpack.c.b16 %v1366, %v1358
    %v1615 = vpack.c.b16 %v1367, %v1359
    %v1616 = vpack.c.b16 %v1368, %v1360
    %v1617 = vpack.c.b16 %v1369, %v1361
    %v1618 = vpack.c.b16 %v1370, %v1362
    %v1619 = vpack.c.b16 %v1371, %v1363
    %v1620 = vpack.c.b16 %v1380, %v1372
    %v1621 = vpack.c.b16 %v1381, %v1373
    %v1622 = vpack.c.b16 %v1382, %v1374
    %v1623 = vpack.c.b16 %v1383, %v1375
    %v1624 = vpack.c.b16 %v1384, %v1376
    %v1625 = vpack.c.b16 %v1385, %v1377
    %v1626 = vpack.c.b16 %v1386, %v1378
    %v1627 = vpack.c.b16 %v1387, %v1379
    %v1628 = vpack.c.b16 %v1396, %v1388
    %v1629 = vpack.c.b16 %v1397, %v1389
    %v1630 = vpack.c.b16 %v1398, %v1390
    %v1631 = vpack.c.b16 %v1399, %v1391
    %v1632 = vpack.c.b16 %v1400, %v1392
    %v1633 = vpack.c.b16 %v1401, %v1393
    %v1634 = vpack.c.b16 %v1402, %v1394
    %v1635 = vpack.c.b16 %v1403, %v1395
    %v1636 = vpack.c.b16 %v1412, %v1404
    %v1637 = vpack.c.b16 %v1413, %v1405
    %v1638 = vpack.c.b16 %v1414, %v1406
    %v1639 = vpack.c.b16 %v1415, %v1407
    %v1640 = vpack.c.b16 %v1416, %v1408
    %v1641 = vpack.c.b16 %v1417, %v1409
    %v1642 = vpack.c.b16 %v1418, %v1410
    %v1643 = vpack.c.b16 %v1419, %v1411
    %v1644 = vpack.c.b16 %v1428, %v1420
    %v1645 = vpack.c.b16 %v1429, %v1421
    %v1646 = vpack.c.b16 %v1430, %v1422
    %v1647 = vpack.c.b16 %v1431, %v1423
    %v1648 = vpack.c.b16 %v1432, %v1424
    %v1649 = vpack.c.b16 %v1433, %v1425
    %v1650 = vpack.c.b16 %v1434, %v1426
    %v1651 = vpack.c.b16 %v1435, %v1427
    %v1652 = vpack.c.b16 %v1444, %v1436
    %v1653 = vpack.c.b16 %v1445, %v1437
    %v1654 = vpack.c.b16 %v1446, %v1438
    %v1655 = vpack.c.b16 %v1447, %v1439
    %v1656 = vpack.c.b16 %v1448, %v1440
    %v1657 = vpack.c.b16 %v1449, %v1441
    %v1658 = vpack.c.b16 %v1450, %v1442
    %v1659 = vpack.c.b16 %v1451, %v1443
    %v1660 = vpack.c.b16 %v1460, %v1452
    %v1661 = vpack.c.b16 %v1461, %v1453
    %v1662 = vpack.c.b16 %v1462, %v1454
    %v1663 = vpack.c.b16 %v1463, %v1455
    %v1664 = vpack.c.b16 %v1464, %v1456
    %v1665 = vpack.c.b16 %v1465, %v1457
    %v1666 = vpack.c.b16 %v1466, %v1458
    %v1667 = vpack.c.b16 %v1467, %v1459
    %v1668 = vpack.c.b16 %v1476, %v1468
    %v1669 = vpack.c.b16 %v1477, %v1469
    %v1670 = vpack.c.b16 %v1478, %v1470
    %v1671 = vpack.c.b16 %v1479, %v1471
    %v1672 = vpack.c.b16 %v1480, %v1472
    %v1673 = vpack.c.b16 %v1481, %v1473
    %v1674 = vpack.c.b16 %v1482, %v1474
    %v1675 = vpack.c.b16 %v1483, %v1475
    %v1676 = vpack.c.b16 %v1492, %v1484
    %v1677 = vpack.c.b16 %v1493, %v1485
    %v1678 = vpack.c.b16 %v1494, %v1486
    %v1679 = vpack.c.b16 %v1495, %v1487
    %v1680 = vpack.c.b16 %v1496, %v1488
    %v1681 = vpack.c.b16 %v1497, %v1489
    %v1682 = vpack.c.b16 %v1498, %v1490
    %v1683 = vpack.c.b16 %v1499, %v1491
    %v1684 = vpack.c.b16 %v1508, %v1500
    %v1685 = vpack.c.b16 %v1509, %v1501
    %v1686 = vpack.c.b16 %v1510, %v1502
    %v1687 = vpack.c.b16 %v1511, %v1503
    %v1688 = vpack.c.b16 %v1512, %v1504
    %v1689 = vpack.c.b16 %v1513, %v1505
    %v1690 = vpack.c.b16 %v1514, %v1506
    %v1691 = vpack.c.b16 %v1515, %v1507
    %v1692 = vpack.c.b16 %v1524, %v1516
    %v1693 = vpack.c.b16 %v1525, %v1517
    %v1694 = vpack.c.b16 %v1526, %v1518
    %v1695 = vpack.c.b16 %v1527, %v1519
    %v1696 = vpack.c.b16 %v1528, %v1520
    %v1697 = vpack.c.b16 %v1529, %v1521
    %v1698 = vpack.c.b16 %v1530, %v1522
    %v1699 = vpack.c.b16 %v1531, %v1523
    %v1700 = vpack.c.b16 %v1540, %v1532
    %v1701 = vpack.c.b16 %v1541, %v1533
    %v1702 = vpack.c.b16 %v1542, %v1534
    %v1703 = vpack.c.b16 %v1543, %v1535
    %v1704 = vpack.c.b16 %v1544, %v1536
    %v1705 = vpack.c.b16 %v1545, %v1537
    %v1706 = vpack.c.b16 %v1546, %v1538
    %v1707 = vpack.c.b16 %v1547, %v1539
    %v1708 = vpack.c.b16 %v1556, %v1548
    %v1709 = vpack.c.b16 %v1557, %v1549
    %v1710 = vpack.c.b16 %v1558, %v1550
    %v1711 = vpack.c.b16 %v1559, %v1551
    %v1712 = vpack.c.b16 %v1560, %v1552
    %v1713 = vpack.c.b16 %v1561, %v1553
    %v1714 = vpack.c.b16 %v1562, %v1554
    %v1715 = vpack.c.b16 %v1563, %v1555
    %v1716 = vpack.c.b16 %v1572, %v1564
    %v1717 = vpack.c.b16 %v1573, %v1565
    %v1718 = vpack.c.b16 %v1574, %v1566
    %v1719 = vpack.c.b16 %v1575, %v1567
    %v1720 = vpack.c.b16 %v1576, %v1568
    %v1721 = vpack.c.b16 %v1577, %v1569
    %v1722 = vpack.c.b16 %v1578, %v1570
    %v1723 = vpack.c.b16 %v1579, %v1571
    %v1724 = vpack.c.b16 %v1588, %v1580
    %v1725 = vpack.c.b16 %v1589, %v1581
    %v1726 = vpack.c.b16 %v1590, %v1582
    %v1727 = vpack.c.b16 %v1591, %v1583
    %v1728 = vpack.c.b16 %v1592, %v1584
    %v1729 = vpack.c.b16 %v1593, %v1585
    %v1730 = vpack.c.b16 %v1594, %v1586
    %v1731 = vpack.c.b16 %v1595, %v1587
    %v1732 = vpack.c.b16 %v1604, %v1596
    %v1733 = vpack.c.b16 %v1605, %v1597
    %v1734 = vpack.c.b16 %v1606, %v1598
    %v1735 = vpack.c.b16 %v1607, %v1599
    %v1736 = vpack.c.b16 %v1608, %v1600
    %v1737 = vpack.c.b16 %v1609, %v1601
    %v1738 = vpack.c.b16 %v1610, %v1602
    %v1739 = vpack.c.b16 %v1611, %v1603
    %1868 = vmatpush.bf16.msra.mxu0 %v1668
    %1869 = vmatpush.bf16.msra.mxu0 %v1660
    %1870 = vmatpush.bf16.msra.mxu0 %v1652
    %1871 = vmatpush.bf16.msra.mxu0 %v1644
    %1872 = vmatpush.bf16.msra.mxu0 %v1636
    %1873 = vmatpush.bf16.msra.mxu0 %v1628
    %1874 = vmatpush.bf16.msra.mxu0 %v1620
    %1875 = vmatpush.bf16.msra.mxu0 %v1612
    %1876 = vmatmul.bf16.gmra.mxu0 %v1080
    %v1877 = vpop.f32.mrf.mxu0
    %v1878 = vadd.f32 %v1212, %v1877
    %v1879 = vpop.f32.mrf.mxu0
    %1880 = vdwg.mxu0
    %1881 = vmatpush.bf16.msra.mxu0 %v1732
    %1882 = vmatpush.bf16.msra.mxu0 %v1724
    %1883 = vmatpush.bf16.msra.mxu0 %v1716
    %1884 = vmatpush.bf16.msra.mxu0 %v1708
    %1885 = vmatpush.bf16.msra.mxu0 %v1700
    %1886 = vmatpush.bf16.msra.mxu0 %v1692
    %1887 = vmatpush.bf16.msra.mxu0 %v1684
    %1888 = vmatpush.bf16.msra.mxu0 %v1676
    %1889 = vmatmul.bf16.gmra.mxu0 %v1081
    %v1890 = vpop.f32.mrf.mxu0
    %v1891 = vadd.f32 %v1878, %v1890
    %v1892 = vpop.f32.mrf.mxu0
    %1893 = vdwg.mxu0
    %1894 = vmatpush.bf16.msra.mxu0 %v1669
    %1895 = vmatpush.bf16.msra.mxu0 %v1661
    %1896 = vmatpush.bf16.msra.mxu0 %v1653
    %1897 = vmatpush.bf16.msra.mxu0 %v1645
    %1898 = vmatpush.bf16.msra.mxu0 %v1637
    %1899 = vmatpush.bf16.msra.mxu0 %v1629
    %1900 = vmatpush.bf16.msra.mxu0 %v1621
    %1901 = vmatpush.bf16.msra.mxu0 %v1613
    %1902 = vmatmul.bf16.gmra.mxu0 %v1080
    %v1903 = vpop.f32.mrf.mxu0
    %v1904 = vadd.f32 %v1213, %v1903
    %v1905 = vpop.f32.mrf.mxu0
    %1906 = vdwg.mxu0
    %1907 = vmatpush.bf16.msra.mxu0 %v1733
    %1908 = vmatpush.bf16.msra.mxu0 %v1725
    %1909 = vmatpush.bf16.msra.mxu0 %v1717
    %1910 = vmatpush.bf16.msra.mxu0 %v1709
    %1911 = vmatpush.bf16.msra.mxu0 %v1701
    %1912 = vmatpush.bf16.msra.mxu0 %v1693
    %1913 = vmatpush.bf16.msra.mxu0 %v1685
    %1914 = vmatpush.bf16.msra.mxu0 %v1677
    %1915 = vmatmul.bf16.gmra.mxu0 %v1081
    %v1916 = vpop.f32.mrf.mxu0
    %v1917 = vadd.f32 %v1904, %v1916
    %v1918 = vpop.f32.mrf.mxu0
    %1919 = vdwg.mxu0
    %1920 = vmatpush.bf16.msra.mxu0 %v1670
    %1921 = vmatpush.bf16.msra.mxu0 %v1662
    %1922 = vmatpush.bf16.msra.mxu0 %v1654
    %1923 = vmatpush.bf16.msra.mxu0 %v1646
    %1924 = vmatpush.bf16.msra.mxu0 %v1638
    %1925 = vmatpush.bf16.msra.mxu0 %v1630
    %1926 = vmatpush.bf16.msra.mxu0 %v1622
    %1927 = vmatpush.bf16.msra.mxu0 %v1614
    %1928 = vmatmul.bf16.gmra.mxu0 %v1080
    %v1929 = vpop.f32.mrf.mxu0
    %v1930 = vadd.f32 %v1214, %v1929
    %v1931 = vpop.f32.mrf.mxu0
    %1932 = vdwg.mxu0
    %1933 = vmatpush.bf16.msra.mxu0 %v1734
    %1934 = vmatpush.bf16.msra.mxu0 %v1726
    %1935 = vmatpush.bf16.msra.mxu0 %v1718
    %1936 = vmatpush.bf16.msra.mxu0 %v1710
    %1937 = vmatpush.bf16.msra.mxu0 %v1702
    %1938 = vmatpush.bf16.msra.mxu0 %v1694
    %1939 = vmatpush.bf16.msra.mxu0 %v1686
    %1940 = vmatpush.bf16.msra.mxu0 %v1678
    %1941 = vmatmul.bf16.gmra.mxu0 %v1081
    %v1942 = vpop.f32.mrf.mxu0
    %v1943 = vadd.f32 %v1930, %v1942
    %v1944 = vpop.f32.mrf.mxu0
    %1945 = vdwg.mxu0
    %1946 = vmatpush.bf16.msra.mxu0 %v1671
    %1947 = vmatpush.bf16.msra.mxu0 %v1663
    %1948 = vmatpush.bf16.msra.mxu0 %v1655
    %1949 = vmatpush.bf16.msra.mxu0 %v1647
    %1950 = vmatpush.bf16.msra.mxu0 %v1639
    %1951 = vmatpush.bf16.msra.mxu0 %v1631
    %1952 = vmatpush.bf16.msra.mxu0 %v1623
    %1953 = vmatpush.bf16.msra.mxu0 %v1615
    %1954 = vmatmul.bf16.gmra.mxu0 %v1080
    %v1955 = vpop.f32.mrf.mxu0
    %v1956 = vadd.f32 %v1215, %v1955
    %v1957 = vpop.f32.mrf.mxu0
    %1958 = vdwg.mxu0
    %1959 = vmatpush.bf16.msra.mxu0 %v1735
    %1960 = vmatpush.bf16.msra.mxu0 %v1727
    %1961 = vmatpush.bf16.msra.mxu0 %v1719
    %1962 = vmatpush.bf16.msra.mxu0 %v1711
    %1963 = vmatpush.bf16.msra.mxu0 %v1703
    %1964 = vmatpush.bf16.msra.mxu0 %v1695
    %1965 = vmatpush.bf16.msra.mxu0 %v1687
    %1966 = vmatpush.bf16.msra.mxu0 %v1679
    %1967 = vmatmul.bf16.gmra.mxu0 %v1081
    %v1968 = vpop.f32.mrf.mxu0
    %v1969 = vadd.f32 %v1956, %v1968
    %v1970 = vpop.f32.mrf.mxu0
    %1971 = vdwg.mxu0
    %1972 = vmatpush.bf16.msra.mxu0 %v1672
    %1973 = vmatpush.bf16.msra.mxu0 %v1664
    %1974 = vmatpush.bf16.msra.mxu0 %v1656
    %1975 = vmatpush.bf16.msra.mxu0 %v1648
    %1976 = vmatpush.bf16.msra.mxu0 %v1640
    %1977 = vmatpush.bf16.msra.mxu0 %v1632
    %1978 = vmatpush.bf16.msra.mxu0 %v1624
    %1979 = vmatpush.bf16.msra.mxu0 %v1616
    %1980 = vmatmul.bf16.gmra.mxu0 %v1080
    %v1981 = vpop.f32.mrf.mxu0
    %v1982 = vadd.f32 %v1216, %v1981
    %v1983 = vpop.f32.mrf.mxu0
    %1984 = vdwg.mxu0
    %1985 = vmatpush.bf16.msra.mxu0 %v1736
    %1986 = vmatpush.bf16.msra.mxu0 %v1728
    %1987 = vmatpush.bf16.msra.mxu0 %v1720
    %1988 = vmatpush.bf16.msra.mxu0 %v1712
    %1989 = vmatpush.bf16.msra.mxu0 %v1704
    %1990 = vmatpush.bf16.msra.mxu0 %v1696
    %1991 = vmatpush.bf16.msra.mxu0 %v1688
    %1992 = vmatpush.bf16.msra.mxu0 %v1680
    %1993 = vmatmul.bf16.gmra.mxu0 %v1081
    %v1994 = vpop.f32.mrf.mxu0
    %v1995 = vadd.f32 %v1982, %v1994
    %v1996 = vpop.f32.mrf.mxu0
    %1997 = vdwg.mxu0
    %1998 = vmatpush.bf16.msra.mxu0 %v1673
    %1999 = vmatpush.bf16.msra.mxu0 %v1665
    %2000 = vmatpush.bf16.msra.mxu0 %v1657
    %2001 = vmatpush.bf16.msra.mxu0 %v1649
    %2002 = vmatpush.bf16.msra.mxu0 %v1641
    %2003 = vmatpush.bf16.msra.mxu0 %v1633
    %2004 = vmatpush.bf16.msra.mxu0 %v1625
    %2005 = vmatpush.bf16.msra.mxu0 %v1617
    %2006 = vmatmul.bf16.gmra.mxu0 %v1080
    %v2007 = vpop.f32.mrf.mxu0
    %v2008 = vadd.f32 %v1217, %v2007
    %v2009 = vpop.f32.mrf.mxu0
    %2010 = vdwg.mxu0
    %2011 = vmatpush.bf16.msra.mxu0 %v1737
    %2012 = vmatpush.bf16.msra.mxu0 %v1729
    %2013 = vmatpush.bf16.msra.mxu0 %v1721
    %2014 = vmatpush.bf16.msra.mxu0 %v1713
    %2015 = vmatpush.bf16.msra.mxu0 %v1705
    %2016 = vmatpush.bf16.msra.mxu0 %v1697
    %2017 = vmatpush.bf16.msra.mxu0 %v1689
    %2018 = vmatpush.bf16.msra.mxu0 %v1681
    %2019 = vmatmul.bf16.gmra.mxu0 %v1081
    %v2020 = vpop.f32.mrf.mxu0
    %v2021 = vadd.f32 %v2008, %v2020
    %v2022 = vpop.f32.mrf.mxu0
    %2023 = vdwg.mxu0
    %2024 = vmatpush.bf16.msra.mxu0 %v1674
    %2025 = vmatpush.bf16.msra.mxu0 %v1666
    %2026 = vmatpush.bf16.msra.mxu0 %v1658
    %2027 = vmatpush.bf16.msra.mxu0 %v1650
    %2028 = vmatpush.bf16.msra.mxu0 %v1642
    %2029 = vmatpush.bf16.msra.mxu0 %v1634
    %2030 = vmatpush.bf16.msra.mxu0 %v1626
    %2031 = vmatpush.bf16.msra.mxu0 %v1618
    %2032 = vmatmul.bf16.gmra.mxu0 %v1080
    %v2033 = vpop.f32.mrf.mxu0
    %v2034 = vadd.f32 %v1218, %v2033
    %v2035 = vpop.f32.mrf.mxu0
    %2036 = vdwg.mxu0
    %2037 = vmatpush.bf16.msra.mxu0 %v1738
    %2038 = vmatpush.bf16.msra.mxu0 %v1730
    %2039 = vmatpush.bf16.msra.mxu0 %v1722
    %2040 = vmatpush.bf16.msra.mxu0 %v1714
    %2041 = vmatpush.bf16.msra.mxu0 %v1706
    %2042 = vmatpush.bf16.msra.mxu0 %v1698
    %2043 = vmatpush.bf16.msra.mxu0 %v1690
    %2044 = vmatpush.bf16.msra.mxu0 %v1682
    %2045 = vmatmul.bf16.gmra.mxu0 %v1081
    %v2046 = vpop.f32.mrf.mxu0
    %v2047 = vadd.f32 %v2034, %v2046
    %v2048 = vpop.f32.mrf.mxu0
    %2049 = vdwg.mxu0
    %2050 = vmatpush.bf16.msra.mxu0 %v1675
    %2051 = vmatpush.bf16.msra.mxu0 %v1667
    %2052 = vmatpush.bf16.msra.mxu0 %v1659
    %2053 = vmatpush.bf16.msra.mxu0 %v1651
    %2054 = vmatpush.bf16.msra.mxu0 %v1643
    %2055 = vmatpush.bf16.msra.mxu0 %v1635
    %2056 = vmatpush.bf16.msra.mxu0 %v1627
    %2057 = vmatpush.bf16.msra.mxu0 %v1619
    %2058 = vmatmul.bf16.gmra.mxu0 %v1080
    %v2059 = vpop.f32.mrf.mxu0
    %v2060 = vadd.f32 %v1219, %v2059
    %v2061 = vpop.f32.mrf.mxu0
    %2062 = vdwg.mxu0
    %2063 = vmatpush.bf16.msra.mxu0 %v1739
    %2064 = vmatpush.bf16.msra.mxu0 %v1731
    %2065 = vmatpush.bf16.msra.mxu0 %v1723
    %2066 = vmatpush.bf16.msra.mxu0 %v1715
    %2067 = vmatpush.bf16.msra.mxu0 %v1707
    %2068 = vmatpush.bf16.msra.mxu0 %v1699
    %2069 = vmatpush.bf16.msra.mxu0 %v1691
    %2070 = vmatpush.bf16.msra.mxu0 %v1683
    %2071 = vmatmul.bf16.gmra.mxu0 %v1081
    %v2072 = vpop.f32.mrf.mxu0
    %v2073 = vadd.f32 %v2060, %v2072
    %v2074 = vpop.f32.mrf.mxu0
    %2075 = vdwg.mxu0
    %v2076 = vmax.f32 %v1891, 0.0
    %v2077 = vmax.f32 %v1917, 0.0
    %v2078 = vmax.f32 %v1943, 0.0
    %v2079 = vmax.f32 %v1969, 0.0
    %v2080 = vmax.f32 %v1995, 0.0
    %v2081 = vmax.f32 %v2021, 0.0
    %v2082 = vmax.f32 %v2047, 0.0
    %v2083 = vmax.f32 %v2073, 0.0
    %v2084 = vpack.c.bf16 %v2076, %v2076
    %v2085 = vpack.c.bf16 %v2077, %v2077
    %v2086 = vpack.c.bf16 %v2078, %v2078
    %v2087 = vpack.c.bf16 %v2079, %v2079
    %v2088 = vpack.c.bf16 %v2080, %v2080
    %v2089 = vpack.c.bf16 %v2081, %v2081
    %v2090 = vpack.c.bf16 %v2082, %v2082
    %v2091 = vpack.c.bf16 %v2083, %v2083
    %v2092 = vld [vmem:[#allocation6] sm:$0xf]
    %v2093 = vld [vmem:[#allocation6 + $0x4] sm:$0xf]
    %v2094 = vld [vmem:[#allocation6 + $0x8] sm:$0xf]
    %v2095 = vld [vmem:[#allocation6 + $0xc] sm:$0xf]
    %v2096 = vld [vmem:[#allocation6 + $0x10] sm:$0xf]
    %v2097 = vld [vmem:[#allocation6 + $0x14] sm:$0xf]
    %v2098 = vld [vmem:[#allocation6 + $0x18] sm:$0xf]
    %v2099 = vld [vmem:[#allocation6 + $0x1c] sm:$0xf]
    %v2100 = vld [vmem:[#allocation6 + $0x20] sm:$0xf]
    %v2101 = vld [vmem:[#allocation6 + $0x24] sm:$0xf]
    %v2102 = vld [vmem:[#allocation6 + $0x28] sm:$0xf]
    %v2103 = vld [vmem:[#allocation6 + $0x2c] sm:$0xf]
    %v2104 = vld [vmem:[#allocation6 + $0x30] sm:$0xf]
    %v2105 = vld [vmem:[#allocation6 + $0x34] sm:$0xf]
    %v2106 = vld [vmem:[#allocation6 + $0x38] sm:$0xf]
    %v2107 = vld [vmem:[#allocation6 + $0x3c] sm:$0xf]
    %v2108 = vld [vmem:[#allocation6 + $0x40] sm:$0xf]
    %v2109 = vld [vmem:[#allocation6 + $0x44] sm:$0xf]
    %v2110 = vld [vmem:[#allocation6 + $0x48] sm:$0xf]
    %v2111 = vld [vmem:[#allocation6 + $0x4c] sm:$0xf]
    %v2112 = vld [vmem:[#allocation6 + $0x50] sm:$0xf]
    %v2113 = vld [vmem:[#allocation6 + $0x54] sm:$0xf]
    %v2114 = vld [vmem:[#allocation6 + $0x58] sm:$0xf]
    %v2115 = vld [vmem:[#allocation6 + $0x5c] sm:$0xf]
    %v2116 = vld [vmem:[#allocation6 + $0x60] sm:$0xf]
    %v2117 = vld [vmem:[#allocation6 + $0x64] sm:$0xf]
    %v2118 = vld [vmem:[#allocation6 + $0x68] sm:$0xf]
    %v2119 = vld [vmem:[#allocation6 + $0x6c] sm:$0xf]
    %v2120 = vld [vmem:[#allocation6 + $0x70] sm:$0xf]
    %v2121 = vld [vmem:[#allocation6 + $0x74] sm:$0xf]
    %v2122 = vld [vmem:[#allocation6 + $0x78] sm:$0xf]
    %v2123 = vld [vmem:[#allocation6 + $0x7c] sm:$0xf]
    %v2124 = vld [vmem:[#allocation6 + $0x80] sm:$0xf]
    %v2125 = vld [vmem:[#allocation6 + $0x84] sm:$0xf]
    %v2126 = vld [vmem:[#allocation6 + $0x88] sm:$0xf]
    %v2127 = vld [vmem:[#allocation6 + $0x8c] sm:$0xf]
    %v2128 = vld [vmem:[#allocation6 + $0x90] sm:$0xf]
    %v2129 = vld [vmem:[#allocation6 + $0x94] sm:$0xf]
    %v2130 = vld [vmem:[#allocation6 + $0x98] sm:$0xf]
    %v2131 = vld [vmem:[#allocation6 + $0x9c] sm:$0xf]
    %v2132 = vld [vmem:[#allocation6 + $0xa0] sm:$0xf]
    %v2133 = vld [vmem:[#allocation6 + $0xa4] sm:$0xf]
    %v2134 = vld [vmem:[#allocation6 + $0xa8] sm:$0xf]
    %v2135 = vld [vmem:[#allocation6 + $0xac] sm:$0xf]
    %v2136 = vld [vmem:[#allocation6 + $0xb0] sm:$0xf]
    %v2137 = vld [vmem:[#allocation6 + $0xb4] sm:$0xf]
    %v2138 = vld [vmem:[#allocation6 + $0xb8] sm:$0xf]
    %v2139 = vld [vmem:[#allocation6 + $0xbc] sm:$0xf]
    %v2140 = vld [vmem:[#allocation6 + $0xc0] sm:$0xf]
    %v2141 = vld [vmem:[#allocation6 + $0xc4] sm:$0xf]
    %v2142 = vld [vmem:[#allocation6 + $0xc8] sm:$0xf]
    %v2143 = vld [vmem:[#allocation6 + $0xcc] sm:$0xf]
    %v2144 = vld [vmem:[#allocation6 + $0xd0] sm:$0xf]
    %v2145 = vld [vmem:[#allocation6 + $0xd4] sm:$0xf]
    %v2146 = vld [vmem:[#allocation6 + $0xd8] sm:$0xf]
    %v2147 = vld [vmem:[#allocation6 + $0xdc] sm:$0xf]
    %v2148 = vld [vmem:[#allocation6 + $0xe0] sm:$0xf]
    %v2149 = vld [vmem:[#allocation6 + $0xe4] sm:$0xf]
    %v2150 = vld [vmem:[#allocation6 + $0xe8] sm:$0xf]
    %v2151 = vld [vmem:[#allocation6 + $0xec] sm:$0xf]
    %v2152 = vld [vmem:[#allocation6 + $0xf0] sm:$0xf]
    %v2153 = vld [vmem:[#allocation6 + $0xf4] sm:$0xf]
    %v2154 = vld [vmem:[#allocation6 + $0xf8] sm:$0xf]
    %v2155 = vld [vmem:[#allocation6 + $0xfc] sm:$0xf]
    %v2156 = vld [vmem:[#allocation6 + $0x100] sm:$0xf]
    %v2157 = vld [vmem:[#allocation6 + $0x104] sm:$0xf]
    %v2158 = vld [vmem:[#allocation6 + $0x108] sm:$0xf]
    %v2159 = vld [vmem:[#allocation6 + $0x10c] sm:$0xf]
    %v2160 = vld [vmem:[#allocation6 + $0x110] sm:$0xf]
    %v2161 = vld [vmem:[#allocation6 + $0x114] sm:$0xf]
    %v2162 = vld [vmem:[#allocation6 + $0x118] sm:$0xf]
    %v2163 = vld [vmem:[#allocation6 + $0x11c] sm:$0xf]
    %v2164 = vld [vmem:[#allocation6 + $0x120] sm:$0xf]
    %v2165 = vld [vmem:[#allocation6 + $0x124] sm:$0xf]
    %v2166 = vld [vmem:[#allocation6 + $0x128] sm:$0xf]
    %v2167 = vld [vmem:[#allocation6 + $0x12c] sm:$0xf]
    %v2168 = vld [vmem:[#allocation6 + $0x130] sm:$0xf]
    %v2169 = vld [vmem:[#allocation6 + $0x134] sm:$0xf]
    %v2170 = vld [vmem:[#allocation6 + $0x138] sm:$0xf]
    %v2171 = vld [vmem:[#allocation6 + $0x13c] sm:$0xf]
    %v2172 = vld [vmem:[#allocation6 + $0x140] sm:$0xf]
    %v2173 = vld [vmem:[#allocation6 + $0x144] sm:$0xf]
    %v2174 = vld [vmem:[#allocation6 + $0x148] sm:$0xf]
    %v2175 = vld [vmem:[#allocation6 + $0x14c] sm:$0xf]
    %v2176 = vld [vmem:[#allocation6 + $0x150] sm:$0xf]
    %v2177 = vld [vmem:[#allocation6 + $0x154] sm:$0xf]
    %v2178 = vld [vmem:[#allocation6 + $0x158] sm:$0xf]
    %v2179 = vld [vmem:[#allocation6 + $0x15c] sm:$0xf]
    %v2180 = vld [vmem:[#allocation6 + $0x160] sm:$0xf]
    %v2181 = vld [vmem:[#allocation6 + $0x164] sm:$0xf]
    %v2182 = vld [vmem:[#allocation6 + $0x168] sm:$0xf]
    %v2183 = vld [vmem:[#allocation6 + $0x16c] sm:$0xf]
    %v2184 = vld [vmem:[#allocation6 + $0x170] sm:$0xf]
    %v2185 = vld [vmem:[#allocation6 + $0x174] sm:$0xf]
    %v2186 = vld [vmem:[#allocation6 + $0x178] sm:$0xf]
    %v2187 = vld [vmem:[#allocation6 + $0x17c] sm:$0xf]
    %v2188 = vld [vmem:[#allocation6 + $0x180] sm:$0xf]
    %v2189 = vld [vmem:[#allocation6 + $0x184] sm:$0xf]
    %v2190 = vld [vmem:[#allocation6 + $0x188] sm:$0xf]
    %v2191 = vld [vmem:[#allocation6 + $0x18c] sm:$0xf]
    %v2192 = vld [vmem:[#allocation6 + $0x190] sm:$0xf]
    %v2193 = vld [vmem:[#allocation6 + $0x194] sm:$0xf]
    %v2194 = vld [vmem:[#allocation6 + $0x198] sm:$0xf]
    %v2195 = vld [vmem:[#allocation6 + $0x19c] sm:$0xf]
    %v2196 = vld [vmem:[#allocation6 + $0x1a0] sm:$0xf]
    %v2197 = vld [vmem:[#allocation6 + $0x1a4] sm:$0xf]
    %v2198 = vld [vmem:[#allocation6 + $0x1a8] sm:$0xf]
    %v2199 = vld [vmem:[#allocation6 + $0x1ac] sm:$0xf]
    %v2200 = vld [vmem:[#allocation6 + $0x1b0] sm:$0xf]
    %v2201 = vld [vmem:[#allocation6 + $0x1b4] sm:$0xf]
    %v2202 = vld [vmem:[#allocation6 + $0x1b8] sm:$0xf]
    %v2203 = vld [vmem:[#allocation6 + $0x1bc] sm:$0xf]
    %v2204 = vld [vmem:[#allocation6 + $0x1c0] sm:$0xf]
    %v2205 = vld [vmem:[#allocation6 + $0x1c4] sm:$0xf]
    %v2206 = vld [vmem:[#allocation6 + $0x1c8] sm:$0xf]
    %v2207 = vld [vmem:[#allocation6 + $0x1cc] sm:$0xf]
    %v2208 = vld [vmem:[#allocation6 + $0x1d0] sm:$0xf]
    %v2209 = vld [vmem:[#allocation6 + $0x1d4] sm:$0xf]
    %v2210 = vld [vmem:[#allocation6 + $0x1d8] sm:$0xf]
    %v2211 = vld [vmem:[#allocation6 + $0x1dc] sm:$0xf]
    %v2212 = vld [vmem:[#allocation6 + $0x1e0] sm:$0xf]
    %v2213 = vld [vmem:[#allocation6 + $0x1e4] sm:$0xf]
    %v2214 = vld [vmem:[#allocation6 + $0x1e8] sm:$0xf]
    %v2215 = vld [vmem:[#allocation6 + $0x1ec] sm:$0xf]
    %v2216 = vld [vmem:[#allocation6 + $0x1f0] sm:$0xf]
    %v2217 = vld [vmem:[#allocation6 + $0x1f4] sm:$0xf]
    %v2218 = vld [vmem:[#allocation6 + $0x1f8] sm:$0xf]
    %v2219 = vld [vmem:[#allocation6 + $0x1fc] sm:$0xf]
    %v2220 = vld [vmem:[%s5] sm:$0x1]
    %v2222 = vperm.slane %v2220, 0
    %v2352 = vunpack.c.l.b16 %v2092
    %v2353 = vunpack.c.l.b16 %v2093
    %v2354 = vunpack.c.l.b16 %v2094
    %v2355 = vunpack.c.l.b16 %v2095
    %v2356 = vunpack.c.l.b16 %v2096
    %v2357 = vunpack.c.l.b16 %v2097
    %v2358 = vunpack.c.l.b16 %v2098
    %v2359 = vunpack.c.l.b16 %v2099
    %v2360 = vunpack.c.l.b16 %v2100
    %v2361 = vunpack.c.l.b16 %v2101
    %v2362 = vunpack.c.l.b16 %v2102
    %v2363 = vunpack.c.l.b16 %v2103
    %v2364 = vunpack.c.l.b16 %v2104
    %v2365 = vunpack.c.l.b16 %v2105
    %v2366 = vunpack.c.l.b16 %v2106
    %v2367 = vunpack.c.l.b16 %v2107
    %v2368 = vunpack.c.l.b16 %v2108
    %v2369 = vunpack.c.l.b16 %v2109
    %v2370 = vunpack.c.l.b16 %v2110
    %v2371 = vunpack.c.l.b16 %v2111
    %v2372 = vunpack.c.l.b16 %v2112
    %v2373 = vunpack.c.l.b16 %v2113
    %v2374 = vunpack.c.l.b16 %v2114
    %v2375 = vunpack.c.l.b16 %v2115
    %v2376 = vunpack.c.l.b16 %v2116
    %v2377 = vunpack.c.l.b16 %v2117
    %v2378 = vunpack.c.l.b16 %v2118
    %v2379 = vunpack.c.l.b16 %v2119
    %v2380 = vunpack.c.l.b16 %v2120
    %v2381 = vunpack.c.l.b16 %v2121
    %v2382 = vunpack.c.l.b16 %v2122
    %v2383 = vunpack.c.l.b16 %v2123
    %v2384 = vunpack.c.l.b16 %v2124
    %v2385 = vunpack.c.l.b16 %v2125
    %v2386 = vunpack.c.l.b16 %v2126
    %v2387 = vunpack.c.l.b16 %v2127
    %v2388 = vunpack.c.l.b16 %v2128
    %v2389 = vunpack.c.l.b16 %v2129
    %v2390 = vunpack.c.l.b16 %v2130
    %v2391 = vunpack.c.l.b16 %v2131
    %v2392 = vunpack.c.l.b16 %v2132
    %v2393 = vunpack.c.l.b16 %v2133
    %v2394 = vunpack.c.l.b16 %v2134
    %v2395 = vunpack.c.l.b16 %v2135
    %v2396 = vunpack.c.l.b16 %v2136
    %v2397 = vunpack.c.l.b16 %v2137
    %v2398 = vunpack.c.l.b16 %v2138
    %v2399 = vunpack.c.l.b16 %v2139
    %v2400 = vunpack.c.l.b16 %v2140
    %v2401 = vunpack.c.l.b16 %v2141
    %v2402 = vunpack.c.l.b16 %v2142
    %v2403 = vunpack.c.l.b16 %v2143
    %v2404 = vunpack.c.l.b16 %v2144
    %v2405 = vunpack.c.l.b16 %v2145
    %v2406 = vunpack.c.l.b16 %v2146
    %v2407 = vunpack.c.l.b16 %v2147
    %v2408 = vunpack.c.l.b16 %v2148
    %v2409 = vunpack.c.l.b16 %v2149
    %v2410 = vunpack.c.l.b16 %v2150
    %v2411 = vunpack.c.l.b16 %v2151
    %v2412 = vunpack.c.l.b16 %v2152
    %v2413 = vunpack.c.l.b16 %v2153
    %v2414 = vunpack.c.l.b16 %v2154
    %v2415 = vunpack.c.l.b16 %v2155
    %v2416 = vunpack.c.l.b16 %v2156
    %v2417 = vunpack.c.l.b16 %v2157
    %v2418 = vunpack.c.l.b16 %v2158
    %v2419 = vunpack.c.l.b16 %v2159
    %v2420 = vunpack.c.l.b16 %v2160
    %v2421 = vunpack.c.l.b16 %v2161
    %v2422 = vunpack.c.l.b16 %v2162
    %v2423 = vunpack.c.l.b16 %v2163
    %v2424 = vunpack.c.l.b16 %v2164
    %v2425 = vunpack.c.l.b16 %v2165
    %v2426 = vunpack.c.l.b16 %v2166
    %v2427 = vunpack.c.l.b16 %v2167
    %v2428 = vunpack.c.l.b16 %v2168
    %v2429 = vunpack.c.l.b16 %v2169
    %v2430 = vunpack.c.l.b16 %v2170
    %v2431 = vunpack.c.l.b16 %v2171
    %v2432 = vunpack.c.l.b16 %v2172
    %v2433 = vunpack.c.l.b16 %v2173
    %v2434 = vunpack.c.l.b16 %v2174
    %v2435 = vunpack.c.l.b16 %v2175
    %v2436 = vunpack.c.l.b16 %v2176
    %v2437 = vunpack.c.l.b16 %v2177
    %v2438 = vunpack.c.l.b16 %v2178
    %v2439 = vunpack.c.l.b16 %v2179
    %v2440 = vunpack.c.l.b16 %v2180
    %v2441 = vunpack.c.l.b16 %v2181
    %v2442 = vunpack.c.l.b16 %v2182
    %v2443 = vunpack.c.l.b16 %v2183
    %v2444 = vunpack.c.l.b16 %v2184
    %v2445 = vunpack.c.l.b16 %v2185
    %v2446 = vunpack.c.l.b16 %v2186
    %v2447 = vunpack.c.l.b16 %v2187
    %v2448 = vunpack.c.l.b16 %v2188
    %v2449 = vunpack.c.l.b16 %v2189
    %v2450 = vunpack.c.l.b16 %v2190
    %v2451 = vunpack.c.l.b16 %v2191
    %v2452 = vunpack.c.l.b16 %v2192
    %v2453 = vunpack.c.l.b16 %v2193
    %v2454 = vunpack.c.l.b16 %v2194
    %v2455 = vunpack.c.l.b16 %v2195
    %v2456 = vunpack.c.l.b16 %v2196
    %v2457 = vunpack.c.l.b16 %v2197
    %v2458 = vunpack.c.l.b16 %v2198
    %v2459 = vunpack.c.l.b16 %v2199
    %v2460 = vunpack.c.l.b16 %v2200
    %v2461 = vunpack.c.l.b16 %v2201
    %v2462 = vunpack.c.l.b16 %v2202
    %v2463 = vunpack.c.l.b16 %v2203
    %v2464 = vunpack.c.l.b16 %v2204
    %v2465 = vunpack.c.l.b16 %v2205
    %v2466 = vunpack.c.l.b16 %v2206
    %v2467 = vunpack.c.l.b16 %v2207
    %v2468 = vunpack.c.l.b16 %v2208
    %v2469 = vunpack.c.l.b16 %v2209
    %v2470 = vunpack.c.l.b16 %v2210
    %v2471 = vunpack.c.l.b16 %v2211
    %v2472 = vunpack.c.l.b16 %v2212
    %v2473 = vunpack.c.l.b16 %v2213
    %v2474 = vunpack.c.l.b16 %v2214
    %v2475 = vunpack.c.l.b16 %v2215
    %v2476 = vunpack.c.l.b16 %v2216
    %v2477 = vunpack.c.l.b16 %v2217
    %v2478 = vunpack.c.l.b16 %v2218
    %v2479 = vunpack.c.l.b16 %v2219
    %v2480 = vpack.c.b16 %v2353, %v2352
    %v2481 = vpack.c.b16 %v2355, %v2354
    %v2482 = vpack.c.b16 %v2357, %v2356
    %v2483 = vpack.c.b16 %v2359, %v2358
    %v2484 = vpack.c.b16 %v2361, %v2360
    %v2485 = vpack.c.b16 %v2363, %v2362
    %v2486 = vpack.c.b16 %v2365, %v2364
    %v2487 = vpack.c.b16 %v2367, %v2366
    %v2488 = vpack.c.b16 %v2369, %v2368
    %v2489 = vpack.c.b16 %v2371, %v2370
    %v2490 = vpack.c.b16 %v2373, %v2372
    %v2491 = vpack.c.b16 %v2375, %v2374
    %v2492 = vpack.c.b16 %v2377, %v2376
    %v2493 = vpack.c.b16 %v2379, %v2378
    %v2494 = vpack.c.b16 %v2381, %v2380
    %v2495 = vpack.c.b16 %v2383, %v2382
    %v2496 = vpack.c.b16 %v2385, %v2384
    %v2497 = vpack.c.b16 %v2387, %v2386
    %v2498 = vpack.c.b16 %v2389, %v2388
    %v2499 = vpack.c.b16 %v2391, %v2390
    %v2500 = vpack.c.b16 %v2393, %v2392
    %v2501 = vpack.c.b16 %v2395, %v2394
    %v2502 = vpack.c.b16 %v2397, %v2396
    %v2503 = vpack.c.b16 %v2399, %v2398
    %v2504 = vpack.c.b16 %v2401, %v2400
    %v2505 = vpack.c.b16 %v2403, %v2402
    %v2506 = vpack.c.b16 %v2405, %v2404
    %v2507 = vpack.c.b16 %v2407, %v2406
    %v2508 = vpack.c.b16 %v2409, %v2408
    %v2509 = vpack.c.b16 %v2411, %v2410
    %v2510 = vpack.c.b16 %v2413, %v2412
    %v2511 = vpack.c.b16 %v2415, %v2414
    %v2512 = vpack.c.b16 %v2417, %v2416
    %v2513 = vpack.c.b16 %v2419, %v2418
    %v2514 = vpack.c.b16 %v2421, %v2420
    %v2515 = vpack.c.b16 %v2423, %v2422
    %v2516 = vpack.c.b16 %v2425, %v2424
    %v2517 = vpack.c.b16 %v2427, %v2426
    %v2518 = vpack.c.b16 %v2429, %v2428
    %v2519 = vpack.c.b16 %v2431, %v2430
    %v2520 = vpack.c.b16 %v2433, %v2432
    %v2521 = vpack.c.b16 %v2435, %v2434
    %v2522 = vpack.c.b16 %v2437, %v2436
    %v2523 = vpack.c.b16 %v2439, %v2438
    %v2524 = vpack.c.b16 %v2441, %v2440
    %v2525 = vpack.c.b16 %v2443, %v2442
    %v2526 = vpack.c.b16 %v2445, %v2444
    %v2527 = vpack.c.b16 %v2447, %v2446
    %v2528 = vpack.c.b16 %v2449, %v2448
    %v2529 = vpack.c.b16 %v2451, %v2450
    %v2530 = vpack.c.b16 %v2453, %v2452
    %v2531 = vpack.c.b16 %v2455, %v2454
    %v2532 = vpack.c.b16 %v2457, %v2456
    %v2533 = vpack.c.b16 %v2459, %v2458
    %v2534 = vpack.c.b16 %v2461, %v2460
    %v2535 = vpack.c.b16 %v2463, %v2462
    %v2536 = vpack.c.b16 %v2465, %v2464
    %v2537 = vpack.c.b16 %v2467, %v2466
    %v2538 = vpack.c.b16 %v2469, %v2468
    %v2539 = vpack.c.b16 %v2471, %v2470
    %v2540 = vpack.c.b16 %v2473, %v2472
    %v2541 = vpack.c.b16 %v2475, %v2474
    %v2542 = vpack.c.b16 %v2477, %v2476
    %v2543 = vpack.c.b16 %v2479, %v2478
    %2608 = vmatpush.bf16.msra.mxu0 %v2487
    %2609 = vmatpush.bf16.msra.mxu0 %v2486
    %2610 = vmatpush.bf16.msra.mxu0 %v2485
    %2611 = vmatpush.bf16.msra.mxu0 %v2484
    %2612 = vmatpush.bf16.msra.mxu0 %v2483
    %2613 = vmatpush.bf16.msra.mxu0 %v2482
    %2614 = vmatpush.bf16.msra.mxu0 %v2481
    %2615 = vmatpush.bf16.msra.mxu0 %v2480
    %2616 = vmatmul.bf16.gmra.mxu0 %v2084
    %v2617 = vpop.f32.mrf.mxu0
    %v2618 = vadd.f32 %v2222, %v2617
    %v2619 = vpop.f32.mrf.mxu0
    %2620 = vdwg.mxu0
    %2621 = vmatpush.bf16.msra.mxu0 %v2495
    %2622 = vmatpush.bf16.msra.mxu0 %v2494
    %2623 = vmatpush.bf16.msra.mxu0 %v2493
    %2624 = vmatpush.bf16.msra.mxu0 %v2492
    %2625 = vmatpush.bf16.msra.mxu0 %v2491
    %2626 = vmatpush.bf16.msra.mxu0 %v2490
    %2627 = vmatpush.bf16.msra.mxu0 %v2489
    %2628 = vmatpush.bf16.msra.mxu0 %v2488
    %2629 = vmatmul.bf16.gmra.mxu0 %v2085
    %v2630 = vpop.f32.mrf.mxu0
    %v2631 = vadd.f32 %v2618, %v2630
    %v2632 = vpop.f32.mrf.mxu0
    %2633 = vdwg.mxu0
    %2634 = vmatpush.bf16.msra.mxu0 %v2503
    %2635 = vmatpush.bf16.msra.mxu0 %v2502
    %2636 = vmatpush.bf16.msra.mxu0 %v2501
    %2637 = vmatpush.bf16.msra.mxu0 %v2500
    %2638 = vmatpush.bf16.msra.mxu0 %v2499
    %2639 = vmatpush.bf16.msra.mxu0 %v2498
    %2640 = vmatpush.bf16.msra.mxu0 %v2497
    %2641 = vmatpush.bf16.msra.mxu0 %v2496
    %2642 = vmatmul.bf16.gmra.mxu0 %v2086
    %v2643 = vpop.f32.mrf.mxu0
    %v2644 = vadd.f32 %v2631, %v2643
    %v2645 = vpop.f32.mrf.mxu0
    %2646 = vdwg.mxu0
    %2647 = vmatpush.bf16.msra.mxu0 %v2511
    %2648 = vmatpush.bf16.msra.mxu0 %v2510
    %2649 = vmatpush.bf16.msra.mxu0 %v2509
    %2650 = vmatpush.bf16.msra.mxu0 %v2508
    %2651 = vmatpush.bf16.msra.mxu0 %v2507
    %2652 = vmatpush.bf16.msra.mxu0 %v2506
    %2653 = vmatpush.bf16.msra.mxu0 %v2505
    %2654 = vmatpush.bf16.msra.mxu0 %v2504
    %2655 = vmatmul.bf16.gmra.mxu0 %v2087
    %v2656 = vpop.f32.mrf.mxu0
    %v2657 = vadd.f32 %v2644, %v2656
    %v2658 = vpop.f32.mrf.mxu0
    %2659 = vdwg.mxu0
    %2660 = vmatpush.bf16.msra.mxu0 %v2519
    %2661 = vmatpush.bf16.msra.mxu0 %v2518
    %2662 = vmatpush.bf16.msra.mxu0 %v2517
    %2663 = vmatpush.bf16.msra.mxu0 %v2516
    %2664 = vmatpush.bf16.msra.mxu0 %v2515
    %2665 = vmatpush.bf16.msra.mxu0 %v2514
    %2666 = vmatpush.bf16.msra.mxu0 %v2513
    %2667 = vmatpush.bf16.msra.mxu0 %v2512
    %2668 = vmatmul.bf16.gmra.mxu0 %v2088
    %v2669 = vpop.f32.mrf.mxu0
    %v2670 = vadd.f32 %v2657, %v2669
    %v2671 = vpop.f32.mrf.mxu0
    %2672 = vdwg.mxu0
    %2673 = vmatpush.bf16.msra.mxu0 %v2527
    %2674 = vmatpush.bf16.msra.mxu0 %v2526
    %2675 = vmatpush.bf16.msra.mxu0 %v2525
    %2676 = vmatpush.bf16.msra.mxu0 %v2524
    %2677 = vmatpush.bf16.msra.mxu0 %v2523
    %2678 = vmatpush.bf16.msra.mxu0 %v2522
    %2679 = vmatpush.bf16.msra.mxu0 %v2521
    %2680 = vmatpush.bf16.msra.mxu0 %v2520
    %2681 = vmatmul.bf16.gmra.mxu0 %v2089
    %v2682 = vpop.f32.mrf.mxu0
    %v2683 = vadd.f32 %v2670, %v2682
    %v2684 = vpop.f32.mrf.mxu0
    %2685 = vdwg.mxu0
    %2686 = vmatpush.bf16.msra.mxu0 %v2535
    %2687 = vmatpush.bf16.msra.mxu0 %v2534
    %2688 = vmatpush.bf16.msra.mxu0 %v2533
    %2689 = vmatpush.bf16.msra.mxu0 %v2532
    %2690 = vmatpush.bf16.msra.mxu0 %v2531
    %2691 = vmatpush.bf16.msra.mxu0 %v2530
    %2692 = vmatpush.bf16.msra.mxu0 %v2529
    %2693 = vmatpush.bf16.msra.mxu0 %v2528
    %2694 = vmatmul.bf16.gmra.mxu0 %v2090
    %v2695 = vpop.f32.mrf.mxu0
    %v2696 = vadd.f32 %v2683, %v2695
    %v2697 = vpop.f32.mrf.mxu0
    %2698 = vdwg.mxu0
    %2699 = vmatpush.bf16.msra.mxu0 %v2543
    %2700 = vmatpush.bf16.msra.mxu0 %v2542
    %2701 = vmatpush.bf16.msra.mxu0 %v2541
    %2702 = vmatpush.bf16.msra.mxu0 %v2540
    %2703 = vmatpush.bf16.msra.mxu0 %v2539
    %2704 = vmatpush.bf16.msra.mxu0 %v2538
    %2705 = vmatpush.bf16.msra.mxu0 %v2537
    %2706 = vmatpush.bf16.msra.mxu0 %v2536
    %2707 = vmatmul.bf16.gmra.mxu0 %v2091
    %v2708 = vpop.f32.mrf.mxu0
    %v2709 = vadd.f32 %v2696, %v2708
    %v2710 = vpop.f32.mrf.mxu0
    %2711 = vdwg.mxu0
    %2712 = vst [vmem:[%s6] sm:$0xff] %v2709
    // Predicated region
    $region38: #{_downstream_forward_impl.1} parent=1 // pred_check
      _
    $region39: #{_downstream_forward_impl.1} parent=1 // pred_check_branch
      %2714 = sbr.rel (0) target = $region41
    $region40: #{_downstream_forward_impl.1} parent=1 // pred_region
      _
    $region41: #{_downstream_forward_impl.1} parent=1 // pred_fallthru
      _
    // Predicated region
    $region42: #{_downstream_forward_impl.1} parent=1 // pred_check
      _
    $region43: #{_downstream_forward_impl.1} parent=1 // pred_check_branch
      %2716 = sbr.rel (0) target = $region45
    $region44: #{_downstream_forward_impl.1} parent=1 // pred_region
      _
    $region45: #{_downstream_forward_impl.1} parent=1 // pred_fallthru
      _
    %2717 = vsyncpa [#allocation3], 1
    %2718 = vsyncpa [#allocation5], 1

</llo_original>
